<compile_context>
chip_gen: v7x
topology: tpu7x:2x2x1
jax: 0.10.0
libtpu: 0.0.40
codegen_flags: <defaults>
</compile_context>

<pallas_src>
from functools import partial

import numpy as np
import jax
import jax.numpy as jnp
from jax.experimental import pallas as pl
from jax.experimental.pallas import tpu as pltpu


def _round_up(x, m):
    return ((x + m - 1) // m) * m


def _layer_norm(x, gamma, beta, eps=1e-5):
    # E[x^2] - E[x]^2 form: the two lane reductions depend only on x and can
    # issue back-to-back on the XLU (no reduce -> subtract -> reduce chain).
    mu = jnp.mean(x, axis=-1, keepdims=True)
    ms = jnp.mean(x * x, axis=-1, keepdims=True)
    var = ms - mu * mu
    return (x - mu) * jax.lax.rsqrt(var + eps) * gamma + beta


# --------------------------------------------------------------------------
# Kernel: one tile of TILE_B whole graphs, object-major node layout.
# --------------------------------------------------------------------------
def transition_gnn_kernel(
    node_ref,    # [O, TILE_B, obs+A]   bf16  (states | action one-hot), object-major
    wfused_ref,  # [obs+A, 2H]          bf16  [we1_src (action rows 0) | wn1a]
    we1t_ref,    # [obs+A, H]           bf16  we1 target half (action rows 0)
    we2_ref,     # [H, H]               bf16
    we3_ref,     # [H, H]               bf16
    wn1b_ref,    # [H, H]               f32   (agg stays f32 through this matmul)
    wn2_ref,     # [H, H]               bf16
    wn3b_ref,    # [O, H, OUT_LANES]    bf16  wn3 block-placed at cols o*obs:(o+1)*obs
    bfused_ref,  # [1, 2H]              f32   [be1 | bn1]
    bias_ref,    # [7, H]               f32   (be2, ge, bte, be3, bn2, gn, btn)
    bn3_ref,     # [1, OUT_LANES]       f32
    out_ref,     # [TILE_B, OUT_LANES]  bf16  per-graph packed output
):
    f32, bf16 = jnp.float32, jnp.bfloat16
    n_obj, tile_b, in_dim = node_ref.shape
    hidden = we2_ref.shape[0]
    n_off = n_obj - 1
    tile_n = n_obj * tile_b

    be2 = bias_ref[0:1]
    ge = bias_ref[1:2]
    bte = bias_ref[2:3]
    be3 = bias_ref[3:4]
    bn2 = bias_ref[4:5]
    gn = bias_ref[5:6]
    btn = bias_ref[6:7]

    node3 = node_ref[...]                                  # [O, TILE_B, obs+A]
    node2 = node3.reshape(tile_n, in_dim)                  # free leading-dim merge

    # Fused first layers: one dot gives both the edge-MLP source projection
    # (+be1) and the node-MLP node-input projection (+bn1).
    fused = (jnp.dot(node2, wfused_ref[...], preferred_element_type=f32)
             + bfused_ref[...])
    src_pre = fused[:, :hidden]                            # edge L1, source term
    node_l1 = fused[:, hidden:]                            # node L1, node term

    # Build the (O-1) target slabs from the resident node tile (circular shift
    # of the object blocks) and batch them along M.  Action columns of we1t
    # are zero, so full node rows can be used directly as targets.
    tgts = [
        jnp.concatenate([node3[d:], node3[:d]], axis=0).reshape(tile_n, in_dim)
        for d in range(1, n_obj)
    ]
    tgt_all = jnp.concatenate(tgts, axis=0)                # [(O-1)*TILE_N, obs+A]

    # Edge MLP: one pass with M = (O-1)*TILE_N (no per-offset small matmuls).
    e = jnp.dot(tgt_all, we1t_ref[...], preferred_element_type=f32)
    e = e.reshape(n_off, tile_n, hidden) + src_pre[None]
    e = jnp.maximum(e, 0.0).reshape(n_off * tile_n, hidden)
    e = jnp.dot(e.astype(bf16), we2_ref[...], preferred_element_type=f32) + be2
    e = _layer_norm(e, ge, bte)
    e = jnp.maximum(e, 0.0)
    e = jnp.dot(e.astype(bf16), we3_ref[...], preferred_element_type=f32) + be3

    # Segment sum over the source node == sum over the offset axis.
    agg = e.reshape(n_off, tile_n, hidden).sum(axis=0)     # f32 [TILE_N, H]

    # Node MLP (agg kept in f32 for the wn1b matmul).
    h = node_l1 + jnp.dot(agg, wn1b_ref[...], preferred_element_type=f32)
    h = jnp.maximum(h, 0.0)
    h = jnp.dot(h.astype(bf16), wn2_ref[...], preferred_element_type=f32) + bn2
    h = _layer_norm(h, gn, btn)
    h = jnp.maximum(h, 0.0).astype(bf16)

    # Final Linear(H, obs) producing a per-graph packed, lane-dense row:
    # out[b, o*obs:(o+1)*obs] = h[(o, b)] @ wn3 + bn3.
    h3 = h.reshape(n_obj, tile_b, hidden)                  # free leading-dim split
    acc = jnp.dot(h3[0], wn3b_ref[0], preferred_element_type=f32)
    for o in range(1, n_obj):                              # O dots, N=128 lane fill
        acc = acc + jnp.dot(h3[o], wn3b_ref[o], preferred_element_type=f32)
    out_ref[...] = (acc + bn3_ref[...]).astype(out_ref.dtype)


# --------------------------------------------------------------------------
# Wrapper (jitted): layout, padding, weight packing, pallas_call.
# --------------------------------------------------------------------------
@partial(jax.jit, static_argnames=("action_dim",))
def transition_gnn_forward(states, action, params, *, action_dim):
    B, O, obs_dim = states.shape
    assert O > 1, "TransitionGNN kernel assumes num_objects > 1"
    A = action_dim
    H = params["we2"].shape[0]
    f32, bf16 = jnp.float32, jnp.bfloat16
    obsA = obs_dim + A
    OUT_LANES = _round_up(O * obs_dim, 128)

    # --- tiling: TILE_B graphs / step.  Multiple of 16 keeps bf16 leading-dim
    #     reshapes sublane-aligned; ~2048 node rows amortize the ~0.35us/step
    #     pipeline overhead; the cap guarantees >= 2 grid steps whenever
    #     B >= 2*TILE_B so both v7x TensorCores get work.  (For the tiny demo
    #     batch a single step is unavoidable without doubling padded work.)
    ROW_TARGET = 2048
    tile_b = max(16, _round_up(min(B, max(1, ROW_TARGET // O)), 16))
    tile_b = min(tile_b, max(16, _round_up(pl.cdiv(B, 2), 16)))
    B_pad = _round_up(B, tile_b)
    grid = (B_pad // tile_b,)

    # --- object-major node features [O, B_pad, obs+A] (states | action one-hot) ---
    states_p = jnp.pad(states, ((0, B_pad - B), (0, 0), (0, 0)))
    action_p = jnp.pad(action, ((0, B_pad - B),))
    # discrete action, copy_action=False: one_hot(action, A*O).view(-1, A)
    act_vec = (jax.nn.one_hot(action_p, A * O, dtype=f32)
               .reshape(B_pad, O, A).transpose(1, 0, 2))
    node_in = jnp.concatenate([states_p.transpose(1, 0, 2), act_vec], axis=-1)

    # --- weight packing ---
    we1 = params["we1"]                                       # [2*obs, H]
    zA = jnp.zeros((A, H), f32)
    we1_src = jnp.concatenate([we1[:obs_dim], zA], axis=0)    # action rows zero
    we1_tgt = jnp.concatenate([we1[obs_dim:], zA], axis=0)
    wfused = jnp.concatenate([we1_src, params["wn1a"]], axis=1)        # [obsA, 2H]
    bfused = jnp.concatenate([params["be1"], params["bn1"]], axis=1)   # [1, 2H]

    wn3_blocks = jnp.zeros((O, H, OUT_LANES), f32)
    bn3_pack = jnp.zeros((1, OUT_LANES), f32)
    for o in range(O):
        c0 = o * obs_dim
        wn3_blocks = wn3_blocks.at[o, :, c0:c0 + obs_dim].set(params["wn3"])
        bn3_pack = bn3_pack.at[:, c0:c0 + obs_dim].set(params["bn3"])

    bias_h = jnp.concatenate(
        [params["be2"], params["ge"], params["bte"], params["be3"],
         params["bn2"], params["gn"], params["btn"]], axis=0)          # [7, H]

    args = (
        node_in.astype(bf16),
        wfused.astype(bf16), we1_tgt.astype(bf16),
        params["we2"].astype(bf16), params["we3"].astype(bf16),
        params["wn1b"],                                   # f32 on purpose
        params["wn2"].astype(bf16), wn3_blocks.astype(bf16),
        bfused, bias_h, bn3_pack,
    )

    def resident(shape):
        # weights / biases: full-array block, same block every grid step
        return pl.BlockSpec(shape, lambda *_: (0,) * len(shape))

    in_specs = [
        pl.BlockSpec((O, tile_b, obsA), lambda i: (0, i, 0)),
        resident((obsA, 2 * H)),
        resident((obsA, H)),
        resident((H, H)),
        resident((H, H)),
        resident((H, H)),
        resident((H, H)),
        resident((O, H, OUT_LANES)),
        resident((1, 2 * H)),
        resident((7, H)),
        resident((1, OUT_LANES)),
    ]

    out = pl.pallas_call(
        transition_gnn_kernel,
        out_shape=jax.ShapeDtypeStruct((B_pad, OUT_LANES), bf16),
        grid=grid,
        in_specs=in_specs,
        out_specs=pl.BlockSpec((tile_b, OUT_LANES), lambda i: (i, 0)),
        compiler_params=pltpu.CompilerParams(
            dimension_semantics=("parallel",),
            vmem_limit_bytes=32 * 1024 * 1024),   # > v5e's 16 MiB default scoped VMEM
    )(*args)

    # Per-graph packed rows -> [B, O, obs]; no transpose needed (o-major packing).
    return out[:B, :O * obs_dim].reshape(B, O, obs_dim).astype(f32)


# --------------------------------------------------------------------------
# Params (module layout: W stored [in_features, out_features]).
# --------------------------------------------------------------------------
def init_params(key, obs_dim, action_dim, hidden_dim):
    H = hidden_dim
    keys = jax.random.split(key, 10)
    s = 0.1
    return {
        # edge_mlp: Linear(2*obs,H) -> relu -> Linear(H,H) -> LN -> relu -> Linear(H,H)
        "we1": jax.random.normal(keys[0], (2 * obs_dim, H), jnp.float32) * s,
        "be1": jax.random.normal(keys[1], (1, H), jnp.float32) * s,
        "we2": jax.random.normal(keys[2], (H, H), jnp.float32) * s,
        "be2": jax.random.normal(keys[3], (1, H), jnp.float32) * s,
        "ge": jnp.ones((1, H), jnp.float32),
        "bte": jnp.zeros((1, H), jnp.float32),
        "we3": jax.random.normal(keys[4], (H, H), jnp.float32) * s,
        "be3": jax.random.normal(keys[5], (1, H), jnp.float32) * s,
        # node_mlp: Linear(obs+act+H,H) -> relu -> Linear(H,H) -> LN -> relu -> Linear(H,obs)
        "wn1a": jax.random.normal(keys[6], (obs_dim + action_dim, H), jnp.float32) * s,
        "wn1b": jax.random.normal(keys[7], (H, H), jnp.float32) * s,
        "bn1": jnp.zeros((1, H), jnp.float32),
        "wn2": jax.random.normal(keys[8], (H, H), jnp.float32) * s,
        "bn2": jnp.zeros((1, H), jnp.float32),
        "gn": jnp.ones((1, H), jnp.float32),
        "btn": jnp.zeros((1, H), jnp.float32),
        "wn3": jax.random.normal(keys[9], (H, obs_dim), jnp.float32) * s,
        "bn3": jnp.zeros((1, obs_dim), jnp.float32),
    }


# --------------------------------------------------------------------------
# Pure-JAX f32 reference mirroring the PyTorch module (gather + segment sum).
# --------------------------------------------------------------------------
def reference_forward(states, action, params, action_dim):
    B, O, obs_dim = states.shape
    N = B * O
    node_attr = states.reshape(N, obs_dim)

    adj = np.ones((O, O), np.float32) - np.eye(O, dtype=np.float32)
    i_idx, j_idx = np.nonzero(adj)
    offs = (np.arange(B) * O)[:, None]
    rows = (i_idx[None, :] + offs).reshape(-1)
    cols = (j_idx[None, :] + offs).reshape(-1)

    edge_in = jnp.concatenate([node_attr[rows], node_attr[cols]], axis=-1)
    h = jnp.maximum(edge_in @ params["we1"] + params["be1"], 0.0)
    h = h @ params["we2"] + params["be2"]
    h = _layer_norm(h, params["ge"], params["bte"])
    h = jnp.maximum(h, 0.0)
    e_out = h @ params["we3"] + params["be3"]

    agg = jnp.zeros((N, e_out.shape[-1]), jnp.float32).at[rows].add(e_out)

    act_vec = jax.nn.one_hot(action, action_dim * O, dtype=jnp.float32)
    act_vec = act_vec.reshape(N, action_dim)
    node_in = jnp.concatenate([node_attr, act_vec], axis=-1)

    h = node_in @ params["wn1a"] + agg @ params["wn1b"] + params["bn1"]
    h = jnp.maximum(h, 0.0)
    h = h @ params["wn2"] + params["bn2"]
    h = _layer_norm(h, params["gn"], params["btn"])
    h = jnp.maximum(h, 0.0)
    out = h @ params["wn3"] + params["bn3"]
    return out.reshape(B, O, obs_dim)


if __name__ == "__main__":
    B = 2            # batch
    O = 5            # num_objects (num_nodes)
    obs_dim = 4
    action_dim = 4
    hidden_dim = 32

    key = jax.random.PRNGKey(0)
    k_states, k_action, k_params = jax.random.split(key, 3)

    states = jax.random.normal(k_states, (B, O, obs_dim), jnp.float32)
    action = jax.random.randint(k_action, (B,), 0, action_dim * O)  # discrete
    params = init_params(k_params, obs_dim, action_dim, hidden_dim)

    out = transition_gnn_forward(states, action, params, action_dim=action_dim)
    out = jax.block_until_ready(out)
    assert out.shape == (B, O, obs_dim)

    ref = jax.block_until_ready(reference_forward(states, action, params, action_dim))
    # bf16 matmul operands (f32 accumulation) + bf16 output store -> bf16-level tol.
    np.testing.assert_allclose(np.asarray(out), np.asarray(ref), rtol=2e-2, atol=2e-2)

    print("KERNEL_OK")
</pallas_src>

<mosaic_0001>
module attributes {stable_mosaic.version = 11 : i64} {
  func.func @transition_gnn_kernel(%arg0: i32, %arg1: memref<5x16x8xbf16, #tpu.memory_space<vmem>>, %arg2: memref<8x64xbf16, #tpu.memory_space<vmem>>, %arg3: memref<8x32xbf16, #tpu.memory_space<vmem>>, %arg4: memref<32x32xbf16, #tpu.memory_space<vmem>>, %arg5: memref<32x32xbf16, #tpu.memory_space<vmem>>, %arg6: memref<32x32xf32, #tpu.memory_space<vmem>>, %arg7: memref<32x32xbf16, #tpu.memory_space<vmem>>, %arg8: memref<5x32x128xbf16, #tpu.memory_space<vmem>>, %arg9: memref<1x64xf32, #tpu.memory_space<vmem>>, %arg10: memref<7x32xf32, #tpu.memory_space<vmem>>, %arg11: memref<1x128xf32, #tpu.memory_space<vmem>>, %arg12: memref<16x128xbf16, #tpu.memory_space<vmem>>) attributes {dimension_semantics = [#tpu.dimension_semantics<parallel>], iteration_bounds = array<i64: 1>, scalar_prefetch = 0 : i64, scratch_operands = 0 : i64, tpu.core_type = #tpu.core_type<tc>, window_params = [{transform_indices = @transform_0, window_bounds = array<i64: 5, 16, 8>}, {pipeline_mode = #tpu.pipeline_mode<synchronous>, transform_indices = @transform_1, window_bounds = array<i64: 8, 64>}, {pipeline_mode = #tpu.pipeline_mode<synchronous>, transform_indices = @transform_2, window_bounds = array<i64: 8, 32>}, {pipeline_mode = #tpu.pipeline_mode<synchronous>, transform_indices = @transform_3, window_bounds = array<i64: 32, 32>}, {pipeline_mode = #tpu.pipeline_mode<synchronous>, transform_indices = @transform_4, window_bounds = array<i64: 32, 32>}, {pipeline_mode = #tpu.pipeline_mode<synchronous>, transform_indices = @transform_5, window_bounds = array<i64: 32, 32>}, {pipeline_mode = #tpu.pipeline_mode<synchronous>, transform_indices = @transform_6, window_bounds = array<i64: 32, 32>}, {pipeline_mode = #tpu.pipeline_mode<synchronous>, transform_indices = @transform_7, window_bounds = array<i64: 5, 32, 128>}, {pipeline_mode = #tpu.pipeline_mode<synchronous>, transform_indices = @transform_8, window_bounds = array<i64: 1, 64>}, {pipeline_mode = #tpu.pipeline_mode<synchronous>, transform_indices = @transform_9, window_bounds = array<i64: 7, 32>}, {pipeline_mode = #tpu.pipeline_mode<synchronous>, transform_indices = @transform_10, window_bounds = array<i64: 1, 128>}, {transform_indices = @transform_11, window_bounds = array<i64: 16, 128>}]} {
    %c0 = arith.constant 0 : index
    %c0_0 = arith.constant 0 : index
    %0 = vector.load %arg10[%c0, %c0_0] : memref<7x32xf32, #tpu.memory_space<vmem>>, vector<1x32xf32>
    %c1 = arith.constant 1 : index
    %c0_1 = arith.constant 0 : index
    %1 = vector.load %arg10[%c1, %c0_1] : memref<7x32xf32, #tpu.memory_space<vmem>>, vector<1x32xf32>
    %c2 = arith.constant 2 : index
    %c0_2 = arith.constant 0 : index
    %2 = vector.load %arg10[%c2, %c0_2] : memref<7x32xf32, #tpu.memory_space<vmem>>, vector<1x32xf32>
    %c3 = arith.constant 3 : index
    %c0_3 = arith.constant 0 : index
    %3 = vector.load %arg10[%c3, %c0_3] : memref<7x32xf32, #tpu.memory_space<vmem>>, vector<1x32xf32>
    %c4 = arith.constant 4 : index
    %c0_4 = arith.constant 0 : index
    %4 = vector.load %arg10[%c4, %c0_4] : memref<7x32xf32, #tpu.memory_space<vmem>>, vector<1x32xf32>
    %c5 = arith.constant 5 : index
    %c0_5 = arith.constant 0 : index
    %5 = vector.load %arg10[%c5, %c0_5] : memref<7x32xf32, #tpu.memory_space<vmem>>, vector<1x32xf32>
    %c6 = arith.constant 6 : index
    %c0_6 = arith.constant 0 : index
    %6 = vector.load %arg10[%c6, %c0_6] : memref<7x32xf32, #tpu.memory_space<vmem>>, vector<1x32xf32>
    %c0_7 = arith.constant 0 : index
    %c0_8 = arith.constant 0 : index
    %c0_9 = arith.constant 0 : index
    %7 = vector.load %arg1[%c0_7, %c0_8, %c0_9] : memref<5x16x8xbf16, #tpu.memory_space<vmem>>, vector<5x16x8xbf16>
    %8 = vector.shape_cast %7 : vector<5x16x8xbf16> to vector<80x8xbf16>
    %c0_10 = arith.constant 0 : index
    %c0_11 = arith.constant 0 : index
    %9 = vector.load %arg2[%c0_10, %c0_11] : memref<8x64xbf16, #tpu.memory_space<vmem>>, vector<8x64xbf16>
    %cst = arith.constant dense<0.000000e+00> : vector<80x64xf32>
    %10 = tpu.matmul %8, %9, %cst {dimension_numbers = #tpu.dot_dimension_numbers<[1], [0], [0], [1], [0, 0, 1, 1], [], []>} : vector<80x8xbf16>, vector<8x64xbf16>, vector<80x64xf32> -> vector<80x64xf32>
    %c0_12 = arith.constant 0 : index
    %c0_13 = arith.constant 0 : index
    %11 = vector.load %arg9[%c0_12, %c0_13] : memref<1x64xf32, #tpu.memory_space<vmem>>, vector<1x64xf32>
    %12 = vector.broadcast %11 : vector<1x64xf32> to vector<80x64xf32>
    %13 = arith.addf %10, %12 : vector<80x64xf32>
    %14 = vector.extract_strided_slice %13 {offsets = [0, 0], sizes = [80, 32], strides = [1, 1]} : vector<80x64xf32> to vector<80x32xf32>
    %15 = vector.extract_strided_slice %13 {offsets = [0, 32], sizes = [80, 32], strides = [1, 1]} : vector<80x64xf32> to vector<80x32xf32>
    %16 = vector.extract_strided_slice %7 {offsets = [1, 0, 0], sizes = [4, 16, 8], strides = [1, 1, 1]} : vector<5x16x8xbf16> to vector<4x16x8xbf16>
    %17 = vector.extract_strided_slice %7 {offsets = [0, 0, 0], sizes = [1, 16, 8], strides = [1, 1, 1]} : vector<5x16x8xbf16> to vector<1x16x8xbf16>
    %18 = tpu.concatenate %16, %17 in 0 : vector<4x16x8xbf16>, vector<1x16x8xbf16> -> vector<5x16x8xbf16>
    %19 = vector.shape_cast %18 : vector<5x16x8xbf16> to vector<80x8xbf16>
    %20 = vector.extract_strided_slice %7 {offsets = [2, 0, 0], sizes = [3, 16, 8], strides = [1, 1, 1]} : vector<5x16x8xbf16> to vector<3x16x8xbf16>
    %21 = vector.extract_strided_slice %7 {offsets = [0, 0, 0], sizes = [2, 16, 8], strides = [1, 1, 1]} : vector<5x16x8xbf16> to vector<2x16x8xbf16>
    %22 = tpu.concatenate %20, %21 in 0 : vector<3x16x8xbf16>, vector<2x16x8xbf16> -> vector<5x16x8xbf16>
    %23 = vector.shape_cast %22 : vector<5x16x8xbf16> to vector<80x8xbf16>
    %24 = vector.extract_strided_slice %7 {offsets = [3, 0, 0], sizes = [2, 16, 8], strides = [1, 1, 1]} : vector<5x16x8xbf16> to vector<2x16x8xbf16>
    %25 = vector.extract_strided_slice %7 {offsets = [0, 0, 0], sizes = [3, 16, 8], strides = [1, 1, 1]} : vector<5x16x8xbf16> to vector<3x16x8xbf16>
    %26 = tpu.concatenate %24, %25 in 0 : vector<2x16x8xbf16>, vector<3x16x8xbf16> -> vector<5x16x8xbf16>
    %27 = vector.shape_cast %26 : vector<5x16x8xbf16> to vector<80x8xbf16>
    %28 = vector.extract_strided_slice %7 {offsets = [4, 0, 0], sizes = [1, 16, 8], strides = [1, 1, 1]} : vector<5x16x8xbf16> to vector<1x16x8xbf16>
    %29 = vector.extract_strided_slice %7 {offsets = [0, 0, 0], sizes = [4, 16, 8], strides = [1, 1, 1]} : vector<5x16x8xbf16> to vector<4x16x8xbf16>
    %30 = tpu.concatenate %28, %29 in 0 : vector<1x16x8xbf16>, vector<4x16x8xbf16> -> vector<5x16x8xbf16>
    %31 = vector.shape_cast %30 : vector<5x16x8xbf16> to vector<80x8xbf16>
    %32 = tpu.concatenate %19, %23, %27, %31 in 0 : vector<80x8xbf16>, vector<80x8xbf16>, vector<80x8xbf16>, vector<80x8xbf16> -> vector<320x8xbf16>
    %c0_14 = arith.constant 0 : index
    %c0_15 = arith.constant 0 : index
    %33 = vector.load %arg3[%c0_14, %c0_15] : memref<8x32xbf16, #tpu.memory_space<vmem>>, vector<8x32xbf16>
    %cst_16 = arith.constant dense<0.000000e+00> : vector<320x32xf32>
    %34 = tpu.matmul %32, %33, %cst_16 {dimension_numbers = #tpu.dot_dimension_numbers<[1], [0], [0], [1], [0, 0, 1, 1], [], []>} : vector<320x8xbf16>, vector<8x32xbf16>, vector<320x32xf32> -> vector<320x32xf32>
    %35 = vector.shape_cast %34 : vector<320x32xf32> to vector<4x80x32xf32>
    %36 = vector.shape_cast %14 : vector<80x32xf32> to vector<1x80x32xf32>
    %37 = vector.broadcast %36 : vector<1x80x32xf32> to vector<4x80x32xf32>
    %38 = arith.addf %35, %37 : vector<4x80x32xf32>
    %cst_17 = arith.constant 0.000000e+00 : f32
    %39 = vector.broadcast %cst_17 : f32 to vector<4x80x32xf32>
    %40 = arith.maximumf %38, %39 : vector<4x80x32xf32>
    %41 = vector.shape_cast %40 : vector<4x80x32xf32> to vector<320x32xf32>
    %42 = arith.truncf %41 : vector<320x32xf32> to vector<320x32xbf16>
    %c0_18 = arith.constant 0 : index
    %c0_19 = arith.constant 0 : index
    %43 = vector.load %arg4[%c0_18, %c0_19] : memref<32x32xbf16, #tpu.memory_space<vmem>>, vector<32x32xbf16>
    %cst_20 = arith.constant dense<0.000000e+00> : vector<320x32xf32>
    %44 = tpu.matmul %42, %43, %cst_20 {dimension_numbers = #tpu.dot_dimension_numbers<[1], [0], [0], [1], [0, 0, 1, 1], [], []>} : vector<320x32xbf16>, vector<32x32xbf16>, vector<320x32xf32> -> vector<320x32xf32>
    %45 = vector.broadcast %0 : vector<1x32xf32> to vector<320x32xf32>
    %46 = arith.addf %44, %45 : vector<320x32xf32>
    %cst_21 = arith.constant dense<0.000000e+00> : vector<320xf32>
    %47 = vector.multi_reduction <add>, %46, %cst_21 [1] : vector<320x32xf32> to vector<320xf32>
    %48 = vector.shape_cast %47 : vector<320xf32> to vector<320x1xf32>
    %cst_22 = arith.constant 3.200000e+01 : f32
    %49 = vector.broadcast %cst_22 : f32 to vector<320x1xf32>
    %50 = arith.divf %48, %49 : vector<320x1xf32>
    %51 = arith.mulf %46, %46 : vector<320x32xf32>
    %cst_23 = arith.constant dense<0.000000e+00> : vector<320xf32>
    %52 = vector.multi_reduction <add>, %51, %cst_23 [1] : vector<320x32xf32> to vector<320xf32>
    %53 = vector.shape_cast %52 : vector<320xf32> to vector<320x1xf32>
    %cst_24 = arith.constant 3.200000e+01 : f32
    %54 = vector.broadcast %cst_24 : f32 to vector<320x1xf32>
    %55 = arith.divf %53, %54 : vector<320x1xf32>
    %56 = arith.mulf %50, %50 : vector<320x1xf32>
    %57 = arith.subf %55, %56 : vector<320x1xf32>
    %58 = vector.broadcast %50 : vector<320x1xf32> to vector<320x32xf32>
    %59 = arith.subf %46, %58 : vector<320x32xf32>
    %cst_25 = arith.constant 9.99999974E-6 : f32
    %60 = vector.broadcast %cst_25 : f32 to vector<320x1xf32>
    %61 = arith.addf %57, %60 : vector<320x1xf32>
    %62 = math.rsqrt %61 : vector<320x1xf32>
    %63 = vector.broadcast %62 : vector<320x1xf32> to vector<320x32xf32>
    %64 = arith.mulf %59, %63 : vector<320x32xf32>
    %65 = vector.broadcast %1 : vector<1x32xf32> to vector<320x32xf32>
    %66 = arith.mulf %64, %65 : vector<320x32xf32>
    %67 = vector.broadcast %2 : vector<1x32xf32> to vector<320x32xf32>
    %68 = arith.addf %66, %67 : vector<320x32xf32>
    %cst_26 = arith.constant 0.000000e+00 : f32
    %69 = vector.broadcast %cst_26 : f32 to vector<320x32xf32>
    %70 = arith.maximumf %68, %69 : vector<320x32xf32>
    %71 = arith.truncf %70 : vector<320x32xf32> to vector<320x32xbf16>
    %c0_27 = arith.constant 0 : index
    %c0_28 = arith.constant 0 : index
    %72 = vector.load %arg5[%c0_27, %c0_28] : memref<32x32xbf16, #tpu.memory_space<vmem>>, vector<32x32xbf16>
    %cst_29 = arith.constant dense<0.000000e+00> : vector<320x32xf32>
    %73 = tpu.matmul %71, %72, %cst_29 {dimension_numbers = #tpu.dot_dimension_numbers<[1], [0], [0], [1], [0, 0, 1, 1], [], []>} : vector<320x32xbf16>, vector<32x32xbf16>, vector<320x32xf32> -> vector<320x32xf32>
    %74 = vector.broadcast %3 : vector<1x32xf32> to vector<320x32xf32>
    %75 = arith.addf %73, %74 : vector<320x32xf32>
    %76 = vector.shape_cast %75 : vector<320x32xf32> to vector<4x80x32xf32>
    %cst_30 = arith.constant dense<0.000000e+00> : vector<80x32xf32>
    %77 = vector.multi_reduction <add>, %76, %cst_30 [0] : vector<4x80x32xf32> to vector<80x32xf32>
    %c0_31 = arith.constant 0 : index
    %c0_32 = arith.constant 0 : index
    %78 = vector.load %arg6[%c0_31, %c0_32] : memref<32x32xf32, #tpu.memory_space<vmem>>, vector<32x32xf32>
    %cst_33 = arith.constant dense<0.000000e+00> : vector<80x32xf32>
    %79 = tpu.matmul %77, %78, %cst_33 {dimension_numbers = #tpu.dot_dimension_numbers<[1], [0], [0], [1], [0, 0, 1, 1], [], []>} : vector<80x32xf32>, vector<32x32xf32>, vector<80x32xf32> -> vector<80x32xf32>
    %80 = arith.addf %15, %79 : vector<80x32xf32>
    %cst_34 = arith.constant 0.000000e+00 : f32
    %81 = vector.broadcast %cst_34 : f32 to vector<80x32xf32>
    %82 = arith.maximumf %80, %81 : vector<80x32xf32>
    %83 = arith.truncf %82 : vector<80x32xf32> to vector<80x32xbf16>
    %c0_35 = arith.constant 0 : index
    %c0_36 = arith.constant 0 : index
    %84 = vector.load %arg7[%c0_35, %c0_36] : memref<32x32xbf16, #tpu.memory_space<vmem>>, vector<32x32xbf16>
    %cst_37 = arith.constant dense<0.000000e+00> : vector<80x32xf32>
    %85 = tpu.matmul %83, %84, %cst_37 {dimension_numbers = #tpu.dot_dimension_numbers<[1], [0], [0], [1], [0, 0, 1, 1], [], []>} : vector<80x32xbf16>, vector<32x32xbf16>, vector<80x32xf32> -> vector<80x32xf32>
    %86 = vector.broadcast %4 : vector<1x32xf32> to vector<80x32xf32>
    %87 = arith.addf %85, %86 : vector<80x32xf32>
    %cst_38 = arith.constant dense<0.000000e+00> : vector<80xf32>
    %88 = vector.multi_reduction <add>, %87, %cst_38 [1] : vector<80x32xf32> to vector<80xf32>
    %89 = vector.shape_cast %88 : vector<80xf32> to vector<80x1xf32>
    %cst_39 = arith.constant 3.200000e+01 : f32
    %90 = vector.broadcast %cst_39 : f32 to vector<80x1xf32>
    %91 = arith.divf %89, %90 : vector<80x1xf32>
    %92 = arith.mulf %87, %87 : vector<80x32xf32>
    %cst_40 = arith.constant dense<0.000000e+00> : vector<80xf32>
    %93 = vector.multi_reduction <add>, %92, %cst_40 [1] : vector<80x32xf32> to vector<80xf32>
    %94 = vector.shape_cast %93 : vector<80xf32> to vector<80x1xf32>
    %cst_41 = arith.constant 3.200000e+01 : f32
    %95 = vector.broadcast %cst_41 : f32 to vector<80x1xf32>
    %96 = arith.divf %94, %95 : vector<80x1xf32>
    %97 = arith.mulf %91, %91 : vector<80x1xf32>
    %98 = arith.subf %96, %97 : vector<80x1xf32>
    %99 = vector.broadcast %91 : vector<80x1xf32> to vector<80x32xf32>
    %100 = arith.subf %87, %99 : vector<80x32xf32>
    %cst_42 = arith.constant 9.99999974E-6 : f32
    %101 = vector.broadcast %cst_42 : f32 to vector<80x1xf32>
    %102 = arith.addf %98, %101 : vector<80x1xf32>
    %103 = math.rsqrt %102 : vector<80x1xf32>
    %104 = vector.broadcast %103 : vector<80x1xf32> to vector<80x32xf32>
    %105 = arith.mulf %100, %104 : vector<80x32xf32>
    %106 = vector.broadcast %5 : vector<1x32xf32> to vector<80x32xf32>
    %107 = arith.mulf %105, %106 : vector<80x32xf32>
    %108 = vector.broadcast %6 : vector<1x32xf32> to vector<80x32xf32>
    %109 = arith.addf %107, %108 : vector<80x32xf32>
    %cst_43 = arith.constant 0.000000e+00 : f32
    %110 = vector.broadcast %cst_43 : f32 to vector<80x32xf32>
    %111 = arith.maximumf %109, %110 : vector<80x32xf32>
    %112 = arith.truncf %111 : vector<80x32xf32> to vector<80x32xbf16>
    %113 = vector.shape_cast %112 : vector<80x32xbf16> to vector<5x16x32xbf16>
    %114 = vector.extract_strided_slice %113 {offsets = [0, 0, 0], sizes = [1, 16, 32], strides = [1, 1, 1]} : vector<5x16x32xbf16> to vector<1x16x32xbf16>
    %115 = vector.shape_cast %114 : vector<1x16x32xbf16> to vector<16x32xbf16>
    %c0_44 = arith.constant 0 : index
    %c0_45 = arith.constant 0 : index
    %c0_46 = arith.constant 0 : index
    %116 = vector.load %arg8[%c0_44, %c0_45, %c0_46] : memref<5x32x128xbf16, #tpu.memory_space<vmem>>, vector<1x32x128xbf16>
    %117 = vector.shape_cast %116 : vector<1x32x128xbf16> to vector<32x128xbf16>
    %cst_47 = arith.constant dense<0.000000e+00> : vector<16x128xf32>
    %118 = tpu.matmul %115, %117, %cst_47 {dimension_numbers = #tpu.dot_dimension_numbers<[1], [0], [0], [1], [0, 0, 1, 1], [], []>} : vector<16x32xbf16>, vector<32x128xbf16>, vector<16x128xf32> -> vector<16x128xf32>
    %119 = vector.extract_strided_slice %113 {offsets = [1, 0, 0], sizes = [1, 16, 32], strides = [1, 1, 1]} : vector<5x16x32xbf16> to vector<1x16x32xbf16>
    %120 = vector.shape_cast %119 : vector<1x16x32xbf16> to vector<16x32xbf16>
    %c1_48 = arith.constant 1 : index
    %c0_49 = arith.constant 0 : index
    %c0_50 = arith.constant 0 : index
    %121 = vector.load %arg8[%c1_48, %c0_49, %c0_50] : memref<5x32x128xbf16, #tpu.memory_space<vmem>>, vector<1x32x128xbf16>
    %122 = vector.shape_cast %121 : vector<1x32x128xbf16> to vector<32x128xbf16>
    %cst_51 = arith.constant dense<0.000000e+00> : vector<16x128xf32>
    %123 = tpu.matmul %120, %122, %cst_51 {dimension_numbers = #tpu.dot_dimension_numbers<[1], [0], [0], [1], [0, 0, 1, 1], [], []>} : vector<16x32xbf16>, vector<32x128xbf16>, vector<16x128xf32> -> vector<16x128xf32>
    %124 = arith.addf %118, %123 : vector<16x128xf32>
    %125 = vector.extract_strided_slice %113 {offsets = [2, 0, 0], sizes = [1, 16, 32], strides = [1, 1, 1]} : vector<5x16x32xbf16> to vector<1x16x32xbf16>
    %126 = vector.shape_cast %125 : vector<1x16x32xbf16> to vector<16x32xbf16>
    %c2_52 = arith.constant 2 : index
    %c0_53 = arith.constant 0 : index
    %c0_54 = arith.constant 0 : index
    %127 = vector.load %arg8[%c2_52, %c0_53, %c0_54] : memref<5x32x128xbf16, #tpu.memory_space<vmem>>, vector<1x32x128xbf16>
    %128 = vector.shape_cast %127 : vector<1x32x128xbf16> to vector<32x128xbf16>
    %cst_55 = arith.constant dense<0.000000e+00> : vector<16x128xf32>
    %129 = tpu.matmul %126, %128, %cst_55 {dimension_numbers = #tpu.dot_dimension_numbers<[1], [0], [0], [1], [0, 0, 1, 1], [], []>} : vector<16x32xbf16>, vector<32x128xbf16>, vector<16x128xf32> -> vector<16x128xf32>
    %130 = arith.addf %124, %129 : vector<16x128xf32>
    %131 = vector.extract_strided_slice %113 {offsets = [3, 0, 0], sizes = [1, 16, 32], strides = [1, 1, 1]} : vector<5x16x32xbf16> to vector<1x16x32xbf16>
    %132 = vector.shape_cast %131 : vector<1x16x32xbf16> to vector<16x32xbf16>
    %c3_56 = arith.constant 3 : index
    %c0_57 = arith.constant 0 : index
    %c0_58 = arith.constant 0 : index
    %133 = vector.load %arg8[%c3_56, %c0_57, %c0_58] : memref<5x32x128xbf16, #tpu.memory_space<vmem>>, vector<1x32x128xbf16>
    %134 = vector.shape_cast %133 : vector<1x32x128xbf16> to vector<32x128xbf16>
    %cst_59 = arith.constant dense<0.000000e+00> : vector<16x128xf32>
    %135 = tpu.matmul %132, %134, %cst_59 {dimension_numbers = #tpu.dot_dimension_numbers<[1], [0], [0], [1], [0, 0, 1, 1], [], []>} : vector<16x32xbf16>, vector<32x128xbf16>, vector<16x128xf32> -> vector<16x128xf32>
    %136 = arith.addf %130, %135 : vector<16x128xf32>
    %137 = vector.extract_strided_slice %113 {offsets = [4, 0, 0], sizes = [1, 16, 32], strides = [1, 1, 1]} : vector<5x16x32xbf16> to vector<1x16x32xbf16>
    %138 = vector.shape_cast %137 : vector<1x16x32xbf16> to vector<16x32xbf16>
    %c4_60 = arith.constant 4 : index
    %c0_61 = arith.constant 0 : index
    %c0_62 = arith.constant 0 : index
    %139 = vector.load %arg8[%c4_60, %c0_61, %c0_62] : memref<5x32x128xbf16, #tpu.memory_space<vmem>>, vector<1x32x128xbf16>
    %140 = vector.shape_cast %139 : vector<1x32x128xbf16> to vector<32x128xbf16>
    %cst_63 = arith.constant dense<0.000000e+00> : vector<16x128xf32>
    %141 = tpu.matmul %138, %140, %cst_63 {dimension_numbers = #tpu.dot_dimension_numbers<[1], [0], [0], [1], [0, 0, 1, 1], [], []>} : vector<16x32xbf16>, vector<32x128xbf16>, vector<16x128xf32> -> vector<16x128xf32>
    %142 = arith.addf %136, %141 : vector<16x128xf32>
    %c0_64 = arith.constant 0 : index
    %c0_65 = arith.constant 0 : index
    %143 = vector.load %arg11[%c0_64, %c0_65] : memref<1x128xf32, #tpu.memory_space<vmem>>, vector<1x128xf32>
    %144 = vector.broadcast %143 : vector<1x128xf32> to vector<16x128xf32>
    %145 = arith.addf %142, %144 : vector<16x128xf32>
    %146 = arith.truncf %145 : vector<16x128xf32> to vector<16x128xbf16>
    %c0_66 = arith.constant 0 : index
    %c0_67 = arith.constant 0 : index
    %147 = vector.load %arg12[%c0_66, %c0_67] : memref<16x128xbf16, #tpu.memory_space<vmem>>, vector<16x128xbf16>
    tpu.vector_store %arg12[%c0_66, %c0_67], %146 {strides = array<i32>} : memref<16x128xbf16, #tpu.memory_space<vmem>>, vector<16x128xbf16>,
    return
  }
  func.func @transform_0(%arg0: i32) -> (i32, i32, i32) {
    %c0_i32 = arith.constant 0 : i32
    %c0_i32_0 = arith.constant 0 : i32
    %c0_i32_1 = arith.constant 0 : i32
    return %c0_i32, %arg0, %c0_i32_0 : i32, i32, i32
  }
  func.func @transform_1(%arg0: i32) -> (i32, i32) {
    %c0_i32 = arith.constant 0 : i32
    %c0_i32_0 = arith.constant 0 : i32
    %c0_i32_1 = arith.constant 0 : i32
    return %c0_i32, %c0_i32_0 : i32, i32
  }
  func.func @transform_2(%arg0: i32) -> (i32, i32) {
    %c0_i32 = arith.constant 0 : i32
    %c0_i32_0 = arith.constant 0 : i32
    %c0_i32_1 = arith.constant 0 : i32
    return %c0_i32, %c0_i32_0 : i32, i32
  }
  func.func @transform_3(%arg0: i32) -> (i32, i32) {
    %c0_i32 = arith.constant 0 : i32
    %c0_i32_0 = arith.constant 0 : i32
    %c0_i32_1 = arith.constant 0 : i32
    return %c0_i32, %c0_i32_0 : i32, i32
  }
  func.func @transform_4(%arg0: i32) -> (i32, i32) {
    %c0_i32 = arith.constant 0 : i32
    %c0_i32_0 = arith.constant 0 : i32
    %c0_i32_1 = arith.constant 0 : i32
    return %c0_i32, %c0_i32_0 : i32, i32
  }
  func.func @transform_5(%arg0: i32) -> (i32, i32) {
    %c0_i32 = arith.constant 0 : i32
    %c0_i32_0 = arith.constant 0 : i32
    %c0_i32_1 = arith.constant 0 : i32
    return %c0_i32, %c0_i32_0 : i32, i32
  }
  func.func @transform_6(%arg0: i32) -> (i32, i32) {
    %c0_i32 = arith.constant 0 : i32
    %c0_i32_0 = arith.constant 0 : i32
    %c0_i32_1 = arith.constant 0 : i32
    return %c0_i32, %c0_i32_0 : i32, i32
  }
  func.func @transform_7(%arg0: i32) -> (i32, i32, i32) {
    %c0_i32 = arith.constant 0 : i32
    %c0_i32_0 = arith.constant 0 : i32
    %c0_i32_1 = arith.constant 0 : i32
    %c0_i32_2 = arith.constant 0 : i32
    return %c0_i32, %c0_i32_0, %c0_i32_1 : i32, i32, i32
  }
  func.func @transform_8(%arg0: i32) -> (i32, i32) {
    %c0_i32 = arith.constant 0 : i32
    %c0_i32_0 = arith.constant 0 : i32
    %c0_i32_1 = arith.constant 0 : i32
    return %c0_i32, %c0_i32_0 : i32, i32
  }
  func.func @transform_9(%arg0: i32) -> (i32, i32) {
    %c0_i32 = arith.constant 0 : i32
    %c0_i32_0 = arith.constant 0 : i32
    %c0_i32_1 = arith.constant 0 : i32
    return %c0_i32, %c0_i32_0 : i32, i32
  }
  func.func @transform_10(%arg0: i32) -> (i32, i32) {
    %c0_i32 = arith.constant 0 : i32
    %c0_i32_0 = arith.constant 0 : i32
    %c0_i32_1 = arith.constant 0 : i32
    return %c0_i32, %c0_i32_0 : i32, i32
  }
  func.func @transform_11(%arg0: i32) -> (i32, i32) {
    %c0_i32 = arith.constant 0 : i32
    %c0_i32_0 = arith.constant 0 : i32
    return %arg0, %c0_i32 : i32, i32
  }
}

</mosaic_0001>

<llo_original>
// kernel: transition_gnn_forward.1
$region0: #{transition_gnn_forward.1}
  #allocation0 [shape = 'u32[]', space=smem, size = 0x4, offset = 0x4, fixed_abs, tag = 'smem constant byte address 0x4 - core index']
  #allocation1 [shape = 'u32[144,128]{1,0:T(1,128)}', space=vmem, size = 0x12000, scoped, tag = 'internal scratch']
  %s0 = inlined_call_operand.vmem [shape: bf16[5,16,8], index: 0, kind: input, shape index: {}]
  %s1 = inlined_call_operand.vmem [shape: bf16[8,64], index: 1, kind: input, shape index: {}]
  %s2 = inlined_call_operand.vmem [shape: bf16[8,32], index: 2, kind: input, shape index: {}]
  %s3 = inlined_call_operand.vmem [shape: bf16[32,32], index: 3, kind: input, shape index: {}]
  %s4 = inlined_call_operand.vmem [shape: bf16[32,32], index: 4, kind: input, shape index: {}]
  %s5 = inlined_call_operand.vmem [shape: f32[32,32], index: 5, kind: input, shape index: {}]
  %s6 = inlined_call_operand.vmem [shape: bf16[32,32], index: 6, kind: input, shape index: {}]
  %s7 = inlined_call_operand.vmem [shape: bf16[5,32,128], index: 7, kind: input, shape index: {}]
  %s8 = inlined_call_operand.vmem [shape: f32[1,64], index: 8, kind: input, shape index: {}]
  %s9 = inlined_call_operand.vmem [shape: f32[7,32], index: 9, kind: input, shape index: {}]
  %s10 = inlined_call_operand.vmem [shape: f32[1,128], index: 10, kind: input, shape index: {}]
  %s11 = inlined_call_operand.vmem [shape: bf16[16,128], index: 11, kind: output, shape index: {}]
  %s12 = sld [smem:[#allocation0]]
  $region54: #{transition_gnn_forward.1} parent=0
    _
  %s14 = ssub.s32 1, %s12
  %s15 = scalar_select 0, %s14, %s12
  // Predicated region
  $region2: #{transition_gnn_forward.1} parent=0 // pred_check
    _
  $region3: #{transition_gnn_forward.1} parent=0 // pred_check_branch
    %17 = sbr.rel (0) target = $region5
  $region4: #{transition_gnn_forward.1} parent=0 // pred_region
    _
  $region5: #{transition_gnn_forward.1} parent=0 // pred_fallthru
    _
  // Predicated region
  $region6: #{transition_gnn_forward.1} parent=0 // pred_check
    _
  $region7: #{transition_gnn_forward.1} parent=0 // pred_check_branch
    %19 = sbr.rel (0) target = $region9
  $region8: #{transition_gnn_forward.1} parent=0 // pred_region
    _
  $region9: #{transition_gnn_forward.1} parent=0 // pred_fallthru
    _
  // Predicated region
  $region10: #{transition_gnn_forward.1} parent=0 // pred_check
    _
  $region11: #{transition_gnn_forward.1} parent=0 // pred_check_branch
    %21 = sbr.rel (0) target = $region13
  $region12: #{transition_gnn_forward.1} parent=0 // pred_region
    _
  $region13: #{transition_gnn_forward.1} parent=0 // pred_fallthru
    _
  // Predicated region
  $region14: #{transition_gnn_forward.1} parent=0 // pred_check
    _
  $region15: #{transition_gnn_forward.1} parent=0 // pred_check_branch
    %23 = sbr.rel (0) target = $region17
  $region16: #{transition_gnn_forward.1} parent=0 // pred_region
    _
  $region17: #{transition_gnn_forward.1} parent=0 // pred_fallthru
    _
  // Predicated region
  $region18: #{transition_gnn_forward.1} parent=0 // pred_check
    _
  $region19: #{transition_gnn_forward.1} parent=0 // pred_check_branch
    %25 = sbr.rel (0) target = $region21
  $region20: #{transition_gnn_forward.1} parent=0 // pred_region
    _
  $region21: #{transition_gnn_forward.1} parent=0 // pred_fallthru
    _
  // Predicated region
  $region22: #{transition_gnn_forward.1} parent=0 // pred_check
    _
  $region23: #{transition_gnn_forward.1} parent=0 // pred_check_branch
    %27 = sbr.rel (0) target = $region25
  $region24: #{transition_gnn_forward.1} parent=0 // pred_region
    _
  $region25: #{transition_gnn_forward.1} parent=0 // pred_fallthru
    _
  // Predicated region
  $region26: #{transition_gnn_forward.1} parent=0 // pred_check
    _
  $region27: #{transition_gnn_forward.1} parent=0 // pred_check_branch
    %29 = sbr.rel (0) target = $region29
  $region28: #{transition_gnn_forward.1} parent=0 // pred_region
    _
  $region29: #{transition_gnn_forward.1} parent=0 // pred_fallthru
    _
  // Predicated region
  $region30: #{transition_gnn_forward.1} parent=0 // pred_check
    _
  $region31: #{transition_gnn_forward.1} parent=0 // pred_check_branch
    %31 = sbr.rel (0) target = $region33
  $region32: #{transition_gnn_forward.1} parent=0 // pred_region
    _
  $region33: #{transition_gnn_forward.1} parent=0 // pred_fallthru
    _
  // Predicated region
  $region34: #{transition_gnn_forward.1} parent=0 // pred_check
    _
  $region35: #{transition_gnn_forward.1} parent=0 // pred_check_branch
    %33 = sbr.rel (0) target = $region37
  $region36: #{transition_gnn_forward.1} parent=0 // pred_region
    _
  $region37: #{transition_gnn_forward.1} parent=0 // pred_fallthru
    _
  // Predicated region
  $region38: #{transition_gnn_forward.1} parent=0 // pred_check
    _
  $region39: #{transition_gnn_forward.1} parent=0 // pred_check_branch
    %35 = sbr.rel (0) target = $region41
  $region40: #{transition_gnn_forward.1} parent=0 // pred_region
    _
  $region41: #{transition_gnn_forward.1} parent=0 // pred_fallthru
    _
  // Predicated region
  $region42: #{transition_gnn_forward.1} parent=0 // pred_check
    _
  $region43: #{transition_gnn_forward.1} parent=0 // pred_check_branch
    %37 = sbr.rel (0) target = $region45
  $region44: #{transition_gnn_forward.1} parent=0 // pred_region
    _
  $region45: #{transition_gnn_forward.1} parent=0 // pred_fallthru
    _
  %v39 = vld [vmem:[%s9] sm:$0x1]
  %v40 = vld [vmem:[%s9 + $0x1] sm:$0x1]
  %v41 = vld [vmem:[%s9 + $0x2] sm:$0x1]
  %v42 = vld [vmem:[%s9 + $0x3] sm:$0x1]
  %v43 = vld [vmem:[%s9 + $0x4] sm:$0x1]
  %v44 = vld [vmem:[%s9 + $0x5] sm:$0x1]
  %v45 = vld [vmem:[%s9 + $0x6] sm:$0x1]
  %v46 = vld [vmem:[%s0] sm:$0xf]
  %v47 = vld [vmem:[%s0 + $0x4] sm:$0xf]
  %v48 = vld [vmem:[%s0 + $0x8] sm:$0xf]
  %v49 = vld [vmem:[%s0 + $0xc] sm:$0xf]
  %v50 = vld [vmem:[%s0 + $0x10] sm:$0xf]
  %v51 = vld [vmem:[%s0 + $0x14] sm:$0xf]
  %v52 = vld [vmem:[%s0 + $0x18] sm:$0xf]
  %v53 = vld [vmem:[%s0 + $0x1c] sm:$0xf]
  %v54 = vld [vmem:[%s0 + $0x20] sm:$0xf]
  %v55 = vld [vmem:[%s0 + $0x24] sm:$0xf]
  %v56 = vld [vmem:[%s1] sm:$0xf]
  %v57 = vld [vmem:[%s8] sm:$0x1]
  %v59 = vlaneseq
  %v60 = vshrl.u32 %v59, 7
  %v61 = vsub.s32 0, %v60
  %v62 = vrot.slane %v57, %v61
  %v74 = vunpack.c.l.b16 %v46
  %v75 = vunpack.c.l.b16 %v47
  %v76 = vunpack.c.l.b16 %v48
  %v77 = vunpack.c.l.b16 %v49
  %v78 = vunpack.c.l.b16 %v50
  %v79 = vunpack.c.l.b16 %v51
  %v80 = vunpack.c.l.b16 %v52
  %v81 = vunpack.c.l.b16 %v53
  %v82 = vunpack.c.l.b16 %v54
  %v83 = vunpack.c.l.b16 %v55
  %v84 = vpack.c.b16 %v75, %v74
  %v85 = vpack.c.b16 %v77, %v76
  %v86 = vpack.c.b16 %v79, %v78
  %v87 = vpack.c.b16 %v81, %v80
  %v88 = vpack.c.b16 %v83, %v82
  %vm89 = vcmask 64512
  %v91 = vsel %vm89, %v84, 0
  %v94 = vsel %vm89, %v85, 0
  %v97 = vsel %vm89, %v86, 0
  %v100 = vsel %vm89, %v87, 0
  %v103 = vsel %vm89, %v88, 0
  %vm105 = vcmask 1043456
  %v107 = vsel %vm105, %v56, 0
  %109 = vmatprep.subr.bf16.mxu0 0
  %110 = vmatpush1.bf16.msra.mxu0 %v107
  %111 = vmatprep.subr.bf16.mxu0 0
  %112 = vmatpush1.bf16.msra.mxu0 0
  %113 = vmatprep.subr.bf16.mxu0 0
  %114 = vmatpush1.bf16.msra.mxu0 0
  %115 = vmatprep.subr.bf16.mxu0 0
  %116 = vmatpush1.bf16.msra.mxu0 0
  %117 = vmatprep.subr.bf16.mxu0 0
  %118 = vmatpush1.bf16.msra.mxu0 0
  %119 = vmatprep.subr.bf16.mxu0 0
  %120 = vmatpush1.bf16.msra.mxu0 0
  %121 = vmatprep.subr.bf16.mxu0 0
  %122 = vmatpush1.bf16.msra.mxu0 0
  %123 = vmatprep.subr.bf16.mxu0 0
  %124 = vmatpush1.bf16.msra.mxu0 0
  %125 = vmatprep.subr.bf16.mxu0 0
  %126 = vmatpush1.bf16.msra.mxu0 0
  %127 = vmatprep.subr.bf16.mxu0 0
  %128 = vmatpush1.bf16.msra.mxu0 0
  %129 = vmatprep.subr.bf16.mxu0 0
  %130 = vmatpush1.bf16.msra.mxu0 0
  %131 = vmatprep.subr.bf16.mxu0 0
  %132 = vmatpush1.bf16.msra.mxu0 0
  %133 = vmatprep.subr.bf16.mxu0 0
  %134 = vmatpush1.bf16.msra.mxu0 0
  %135 = vmatprep.subr.bf16.mxu0 0
  %136 = vmatpush1.bf16.msra.mxu0 0
  %137 = vmatprep.subr.bf16.mxu0 0
  %138 = vmatpush1.bf16.msra.mxu0 0
  %139 = vmatprep.subr.bf16.mxu0 0
  %140 = vmatpush1.bf16.msra.mxu0 0
  %141 = vmatprep.mubr.bf16.mxu0 0
  %142 = vmatmul.mubr.bf16.gmra.mrb[0].mxu0 %v91
  %v143 = vpop.f32.mrb[0].mxu0
  %v144 = vadd.f32 %v62, %v143
  %v145 = vpop.f32.mrb[0].mxu0
  %v146 = vpop.f32.mrb[0].mxu0
  %v147 = vadd.f32 %v62, %v146
  %v148 = vpop.f32.mrb[0].mxu0
  %149 = vmatprep.mubr.bf16.mxu0 0
  %150 = vmatmul.mubr.bf16.gmra.mrb[0].mxu0 %v94
  %v151 = vpop.f32.mrb[0].mxu0
  %v152 = vadd.f32 %v62, %v151
  %v153 = vpop.f32.mrb[0].mxu0
  %v154 = vpop.f32.mrb[0].mxu0
  %v155 = vadd.f32 %v62, %v154
  %v156 = vpop.f32.mrb[0].mxu0
  %157 = vmatprep.mubr.bf16.mxu0 0
  %158 = vmatmul.mubr.bf16.gmra.mrb[0].mxu0 %v97
  %v159 = vpop.f32.mrb[0].mxu0
  %v160 = vadd.f32 %v62, %v159
  %v161 = vpop.f32.mrb[0].mxu0
  %v162 = vpop.f32.mrb[0].mxu0
  %v163 = vadd.f32 %v62, %v162
  %v164 = vpop.f32.mrb[0].mxu0
  %165 = vmatprep.mubr.bf16.mxu0 0
  %166 = vmatmul.mubr.bf16.gmra.mrb[0].mxu0 %v100
  %v167 = vpop.f32.mrb[0].mxu0
  %v168 = vadd.f32 %v62, %v167
  %v169 = vpop.f32.mrb[0].mxu0
  %v170 = vpop.f32.mrb[0].mxu0
  %v171 = vadd.f32 %v62, %v170
  %v172 = vpop.f32.mrb[0].mxu0
  %173 = vmatprep.mubr.bf16.mxu0 0
  %174 = vmatmul.mubr.bf16.gmra.mrb[0].mxu0 %v103
  %v175 = vpop.f32.mrb[0].mxu0
  %v176 = vadd.f32 %v62, %v175
  %v177 = vpop.f32.mrb[0].mxu0
  %v178 = vpop.f32.mrb[0].mxu0
  %v179 = vadd.f32 %v62, %v178
  %v180 = vpop.f32.mrb[0].mxu0
  %181 = vdwg.mxu0
  %v182 = vld [vmem:[%s2] sm:$0xf]
  %v184 = vsel %vm105, %v182, 0
  %186 = vmatprep.subr.bf16.mxu0 0
  %187 = vmatpush1.bf16.msra.mxu0 %v184
  %188 = vmatprep.subr.bf16.mxu0 0
  %189 = vmatpush1.bf16.msra.mxu0 0
  %190 = vmatprep.subr.bf16.mxu0 0
  %191 = vmatpush1.bf16.msra.mxu0 0
  %192 = vmatprep.subr.bf16.mxu0 0
  %193 = vmatpush1.bf16.msra.mxu0 0
  %194 = vmatprep.subr.bf16.mxu0 0
  %195 = vmatpush1.bf16.msra.mxu0 0
  %196 = vmatprep.subr.bf16.mxu0 0
  %197 = vmatpush1.bf16.msra.mxu0 0
  %198 = vmatprep.subr.bf16.mxu0 0
  %199 = vmatpush1.bf16.msra.mxu0 0
  %200 = vmatprep.subr.bf16.mxu0 0
  %201 = vmatpush1.bf16.msra.mxu0 0
  %202 = vmatprep.subr.bf16.mxu0 0
  %203 = vmatpush1.bf16.msra.mxu0 0
  %204 = vmatprep.subr.bf16.mxu0 0
  %205 = vmatpush1.bf16.msra.mxu0 0
  %206 = vmatprep.subr.bf16.mxu0 0
  %207 = vmatpush1.bf16.msra.mxu0 0
  %208 = vmatprep.subr.bf16.mxu0 0
  %209 = vmatpush1.bf16.msra.mxu0 0
  %210 = vmatprep.subr.bf16.mxu0 0
  %211 = vmatpush1.bf16.msra.mxu0 0
  %212 = vmatprep.subr.bf16.mxu0 0
  %213 = vmatpush1.bf16.msra.mxu0 0
  %214 = vmatprep.subr.bf16.mxu0 0
  %215 = vmatpush1.bf16.msra.mxu0 0
  %216 = vmatprep.subr.bf16.mxu0 0
  %217 = vmatpush1.bf16.msra.mxu0 0
  %218 = vmatprep.mubr.bf16.mxu0 0
  %219 = vmatmul.mubr.bf16.gmra.mrb[0].mxu0 %v94
  %v220 = vpop.f32.mrb[0].mxu0
  %v221 = vadd.f32 0.0, %v220
  %v222 = vpop.f32.mrb[0].mxu0
  %v223 = vpop.f32.mrb[0].mxu0
  %v224 = vadd.f32 0.0, %v223
  %v225 = vpop.f32.mrb[0].mxu0
  %226 = vmatprep.mubr.bf16.mxu0 0
  %227 = vmatmul.mubr.bf16.gmra.mrb[0].mxu0 %v97
  %v228 = vpop.f32.mrb[0].mxu0
  %v229 = vadd.f32 0.0, %v228
  %v230 = vpop.f32.mrb[0].mxu0
  %v231 = vpop.f32.mrb[0].mxu0
  %v232 = vadd.f32 0.0, %v231
  %v233 = vpop.f32.mrb[0].mxu0
  %234 = vmatprep.mubr.bf16.mxu0 0
  %235 = vmatmul.mubr.bf16.gmra.mrb[0].mxu0 %v100
  %v236 = vpop.f32.mrb[0].mxu0
  %v237 = vadd.f32 0.0, %v236
  %v238 = vpop.f32.mrb[0].mxu0
  %v239 = vpop.f32.mrb[0].mxu0
  %v240 = vadd.f32 0.0, %v239
  %v241 = vpop.f32.mrb[0].mxu0
  %242 = vmatprep.mubr.bf16.mxu0 0
  %243 = vmatmul.mubr.bf16.gmra.mrb[0].mxu0 %v103
  %v244 = vpop.f32.mrb[0].mxu0
  %v245 = vadd.f32 0.0, %v244
  %v246 = vpop.f32.mrb[0].mxu0
  %v247 = vpop.f32.mrb[0].mxu0
  %v248 = vadd.f32 0.0, %v247
  %v249 = vpop.f32.mrb[0].mxu0
  %250 = vmatprep.mubr.bf16.mxu0 0
  %251 = vmatmul.mubr.bf16.gmra.mrb[0].mxu0 %v91
  %v252 = vpop.f32.mrb[0].mxu0
  %v253 = vadd.f32 0.0, %v252
  %v254 = vpop.f32.mrb[0].mxu0
  %v255 = vpop.f32.mrb[0].mxu0
  %v256 = vadd.f32 0.0, %v255
  %v257 = vpop.f32.mrb[0].mxu0
  %258 = vmatprep.mubr.bf16.mxu0 0
  %259 = vmatmul.mubr.bf16.gmra.mrb[0].mxu0 %v97
  %v260 = vpop.f32.mrb[0].mxu0
  %v261 = vadd.f32 0.0, %v260
  %v262 = vpop.f32.mrb[0].mxu0
  %v263 = vpop.f32.mrb[0].mxu0
  %v264 = vadd.f32 0.0, %v263
  %v265 = vpop.f32.mrb[0].mxu0
  %266 = vmatprep.mubr.bf16.mxu0 0
  %267 = vmatmul.mubr.bf16.gmra.mrb[0].mxu0 %v100
  %v268 = vpop.f32.mrb[0].mxu0
  %v269 = vadd.f32 0.0, %v268
  %v270 = vpop.f32.mrb[0].mxu0
  %v271 = vpop.f32.mrb[0].mxu0
  %v272 = vadd.f32 0.0, %v271
  %v273 = vpop.f32.mrb[0].mxu0
  %274 = vmatprep.mubr.bf16.mxu0 0
  %275 = vmatmul.mubr.bf16.gmra.mrb[0].mxu0 %v103
  %v276 = vpop.f32.mrb[0].mxu0
  %v277 = vadd.f32 0.0, %v276
  %v278 = vpop.f32.mrb[0].mxu0
  %v279 = vpop.f32.mrb[0].mxu0
  %v280 = vadd.f32 0.0, %v279
  %v281 = vpop.f32.mrb[0].mxu0
  %282 = vmatprep.mubr.bf16.mxu0 0
  %283 = vmatmul.mubr.bf16.gmra.mrb[0].mxu0 %v91
  %v284 = vpop.f32.mrb[0].mxu0
  %v285 = vadd.f32 0.0, %v284
  %v286 = vpop.f32.mrb[0].mxu0
  %v287 = vpop.f32.mrb[0].mxu0
  %v288 = vadd.f32 0.0, %v287
  %v289 = vpop.f32.mrb[0].mxu0
  %290 = vmatprep.mubr.bf16.mxu0 0
  %291 = vmatmul.mubr.bf16.gmra.mrb[0].mxu0 %v94
  %v292 = vpop.f32.mrb[0].mxu0
  %v293 = vadd.f32 0.0, %v292
  %v294 = vpop.f32.mrb[0].mxu0
  %v295 = vpop.f32.mrb[0].mxu0
  %v296 = vadd.f32 0.0, %v295
  %v297 = vpop.f32.mrb[0].mxu0
  %298 = vmatprep.mubr.bf16.mxu0 0
  %299 = vmatmul.mubr.bf16.gmra.mrb[0].mxu0 %v100
  %v300 = vpop.f32.mrb[0].mxu0
  %v301 = vadd.f32 0.0, %v300
  %v302 = vpop.f32.mrb[0].mxu0
  %v303 = vpop.f32.mrb[0].mxu0
  %v304 = vadd.f32 0.0, %v303
  %v305 = vpop.f32.mrb[0].mxu0
  %306 = vmatprep.mubr.bf16.mxu0 0
  %307 = vmatmul.mubr.bf16.gmra.mrb[0].mxu0 %v103
  %v308 = vpop.f32.mrb[0].mxu0
  %v309 = vadd.f32 0.0, %v308
  %v310 = vpop.f32.mrb[0].mxu0
  %v311 = vpop.f32.mrb[0].mxu0
  %v312 = vadd.f32 0.0, %v311
  %v313 = vpop.f32.mrb[0].mxu0
  %314 = vmatprep.mubr.bf16.mxu0 0
  %315 = vmatmul.mubr.bf16.gmra.mrb[0].mxu0 %v91
  %v316 = vpop.f32.mrb[0].mxu0
  %v317 = vadd.f32 0.0, %v316
  %v318 = vpop.f32.mrb[0].mxu0
  %v319 = vpop.f32.mrb[0].mxu0
  %v320 = vadd.f32 0.0, %v319
  %v321 = vpop.f32.mrb[0].mxu0
  %322 = vmatprep.mubr.bf16.mxu0 0
  %323 = vmatmul.mubr.bf16.gmra.mrb[0].mxu0 %v94
  %v324 = vpop.f32.mrb[0].mxu0
  %v325 = vadd.f32 0.0, %v324
  %v326 = vpop.f32.mrb[0].mxu0
  %v327 = vpop.f32.mrb[0].mxu0
  %v328 = vadd.f32 0.0, %v327
  %v329 = vpop.f32.mrb[0].mxu0
  %330 = vmatprep.mubr.bf16.mxu0 0
  %331 = vmatmul.mubr.bf16.gmra.mrb[0].mxu0 %v97
  %v332 = vpop.f32.mrb[0].mxu0
  %v333 = vadd.f32 0.0, %v332
  %v334 = vpop.f32.mrb[0].mxu0
  %v335 = vpop.f32.mrb[0].mxu0
  %v336 = vadd.f32 0.0, %v335
  %v337 = vpop.f32.mrb[0].mxu0
  %338 = vmatprep.mubr.bf16.mxu0 0
  %339 = vmatmul.mubr.bf16.gmra.mrb[0].mxu0 %v103
  %v340 = vpop.f32.mrb[0].mxu0
  %v341 = vadd.f32 0.0, %v340
  %v342 = vpop.f32.mrb[0].mxu0
  %v343 = vpop.f32.mrb[0].mxu0
  %v344 = vadd.f32 0.0, %v343
  %v345 = vpop.f32.mrb[0].mxu0
  %346 = vmatprep.mubr.bf16.mxu0 0
  %347 = vmatmul.mubr.bf16.gmra.mrb[0].mxu0 %v91
  %v348 = vpop.f32.mrb[0].mxu0
  %v349 = vadd.f32 0.0, %v348
  %v350 = vpop.f32.mrb[0].mxu0
  %v351 = vpop.f32.mrb[0].mxu0
  %v352 = vadd.f32 0.0, %v351
  %v353 = vpop.f32.mrb[0].mxu0
  %354 = vmatprep.mubr.bf16.mxu0 0
  %355 = vmatmul.mubr.bf16.gmra.mrb[0].mxu0 %v94
  %v356 = vpop.f32.mrb[0].mxu0
  %v357 = vadd.f32 0.0, %v356
  %v358 = vpop.f32.mrb[0].mxu0
  %v359 = vpop.f32.mrb[0].mxu0
  %v360 = vadd.f32 0.0, %v359
  %v361 = vpop.f32.mrb[0].mxu0
  %362 = vmatprep.mubr.bf16.mxu0 0
  %363 = vmatmul.mubr.bf16.gmra.mrb[0].mxu0 %v97
  %v364 = vpop.f32.mrb[0].mxu0
  %v365 = vadd.f32 0.0, %v364
  %v366 = vpop.f32.mrb[0].mxu0
  %v367 = vpop.f32.mrb[0].mxu0
  %v368 = vadd.f32 0.0, %v367
  %v369 = vpop.f32.mrb[0].mxu0
  %370 = vmatprep.mubr.bf16.mxu0 0
  %371 = vmatmul.mubr.bf16.gmra.mrb[0].mxu0 %v100
  %v372 = vpop.f32.mrb[0].mxu0
  %v373 = vadd.f32 0.0, %v372
  %v374 = vpop.f32.mrb[0].mxu0
  %v375 = vpop.f32.mrb[0].mxu0
  %v376 = vadd.f32 0.0, %v375
  %v377 = vpop.f32.mrb[0].mxu0
  %378 = vdwg.mxu0
  %v379 = vadd.f32 %v221, %v144
  %v380 = vadd.f32 %v224, %v147
  %v381 = vadd.f32 %v229, %v152
  %v382 = vadd.f32 %v232, %v155
  %v383 = vadd.f32 %v237, %v160
  %v384 = vadd.f32 %v240, %v163
  %v385 = vadd.f32 %v245, %v168
  %v386 = vadd.f32 %v248, %v171
  %v387 = vadd.f32 %v253, %v176
  %v388 = vadd.f32 %v256, %v179
  %v389 = vadd.f32 %v261, %v144
  %v390 = vadd.f32 %v264, %v147
  %v391 = vadd.f32 %v269, %v152
  %v392 = vadd.f32 %v272, %v155
  %v393 = vadd.f32 %v277, %v160
  %v394 = vadd.f32 %v280, %v163
  %v395 = vadd.f32 %v285, %v168
  %v396 = vadd.f32 %v288, %v171
  %v397 = vadd.f32 %v293, %v176
  %v398 = vadd.f32 %v296, %v179
  %v399 = vadd.f32 %v301, %v144
  %v400 = vadd.f32 %v304, %v147
  %v401 = vadd.f32 %v309, %v152
  %v402 = vadd.f32 %v312, %v155
  %v403 = vadd.f32 %v317, %v160
  %v404 = vadd.f32 %v320, %v163
  %v405 = vadd.f32 %v325, %v168
  %v406 = vadd.f32 %v328, %v171
  %v407 = vadd.f32 %v333, %v176
  %v408 = vadd.f32 %v336, %v179
  %v409 = vadd.f32 %v341, %v144
  %v410 = vadd.f32 %v344, %v147
  %v411 = vadd.f32 %v349, %v152
  %v412 = vadd.f32 %v352, %v155
  %v413 = vadd.f32 %v357, %v160
  %v414 = vadd.f32 %v360, %v163
  %v415 = vadd.f32 %v365, %v168
  %v416 = vadd.f32 %v368, %v171
  %v417 = vadd.f32 %v373, %v176
  %v418 = vadd.f32 %v376, %v179
  %v419 = vmax.f32 %v379, 0.0
  %v420 = vmax.f32 %v380, 0.0
  %v421 = vmax.f32 %v381, 0.0
  %v422 = vmax.f32 %v382, 0.0
  %v423 = vmax.f32 %v383, 0.0
  %v424 = vmax.f32 %v384, 0.0
  %v425 = vmax.f32 %v385, 0.0
  %v426 = vmax.f32 %v386, 0.0
  %v427 = vmax.f32 %v387, 0.0
  %v428 = vmax.f32 %v388, 0.0
  %v429 = vmax.f32 %v389, 0.0
  %v430 = vmax.f32 %v390, 0.0
  %v431 = vmax.f32 %v391, 0.0
  %v432 = vmax.f32 %v392, 0.0
  %v433 = vmax.f32 %v393, 0.0
  %v434 = vmax.f32 %v394, 0.0
  %v435 = vmax.f32 %v395, 0.0
  %v436 = vmax.f32 %v396, 0.0
  %v437 = vmax.f32 %v397, 0.0
  %v438 = vmax.f32 %v398, 0.0
  %v439 = vmax.f32 %v399, 0.0
  %v440 = vmax.f32 %v400, 0.0
  %v441 = vmax.f32 %v401, 0.0
  %v442 = vmax.f32 %v402, 0.0
  %v443 = vmax.f32 %v403, 0.0
  %v444 = vmax.f32 %v404, 0.0
  %v445 = vmax.f32 %v405, 0.0
  %v446 = vmax.f32 %v406, 0.0
  %v447 = vmax.f32 %v407, 0.0
  %v448 = vmax.f32 %v408, 0.0
  %v449 = vmax.f32 %v409, 0.0
  %v450 = vmax.f32 %v410, 0.0
  %v451 = vmax.f32 %v411, 0.0
  %v452 = vmax.f32 %v412, 0.0
  %v453 = vmax.f32 %v413, 0.0
  %v454 = vmax.f32 %v414, 0.0
  %v455 = vmax.f32 %v415, 0.0
  %v456 = vmax.f32 %v416, 0.0
  %v457 = vmax.f32 %v417, 0.0
  %v458 = vmax.f32 %v418, 0.0
  %v459 = vpack.c.bf16 %v420, %v419
  %v460 = vpack.c.bf16 %v422, %v421
  %v461 = vpack.c.bf16 %v424, %v423
  %v462 = vpack.c.bf16 %v426, %v425
  %v463 = vpack.c.bf16 %v428, %v427
  %v464 = vpack.c.bf16 %v430, %v429
  %v465 = vpack.c.bf16 %v432, %v431
  %v466 = vpack.c.bf16 %v434, %v433
  %v467 = vpack.c.bf16 %v436, %v435
  %v468 = vpack.c.bf16 %v438, %v437
  %v469 = vpack.c.bf16 %v440, %v439
  %v470 = vpack.c.bf16 %v442, %v441
  %v471 = vpack.c.bf16 %v444, %v443
  %v472 = vpack.c.bf16 %v446, %v445
  %v473 = vpack.c.bf16 %v448, %v447
  %v474 = vpack.c.bf16 %v450, %v449
  %v475 = vpack.c.bf16 %v452, %v451
  %v476 = vpack.c.bf16 %v454, %v453
  %v477 = vpack.c.bf16 %v456, %v455
  %v478 = vpack.c.bf16 %v458, %v457
  %v479 = vld [vmem:[%s3] sm:$0xf]
  %v480 = vld [vmem:[%s3 + $0x4] sm:$0xf]
  %v481 = vld [vmem:[%s3 + $0x8] sm:$0xf]
  %v482 = vld [vmem:[%s3 + $0xc] sm:$0xf]
  %v483 = vlaneseq
  %v484 = vshrl.u32 %v483, 7
  %v485 = vsub.s32 0, %v484
  %v486 = vrot.slane %v39, %v485
  %v491 = vunpack.c.l.b16 %v479
  %v492 = vunpack.c.l.b16 %v480
  %v493 = vunpack.c.l.b16 %v481
  %v494 = vunpack.c.l.b16 %v482
  %v495 = vpack.c.b16 %v492, %v491
  %v496 = vpack.c.b16 %v494, %v493
  %vm499 = vcmask 261120
  %v501 = vsel %vm499, %v459, 0
  %v504 = vsel %vm499, %v460, 0
  %v507 = vsel %vm499, %v461, 0
  %v510 = vsel %vm499, %v462, 0
  %v513 = vsel %vm499, %v463, 0
  %v516 = vsel %vm499, %v464, 0
  %v519 = vsel %vm499, %v465, 0
  %v522 = vsel %vm499, %v466, 0
  %v525 = vsel %vm499, %v467, 0
  %v528 = vsel %vm499, %v468, 0
  %v531 = vsel %vm499, %v469, 0
  %v534 = vsel %vm499, %v470, 0
  %v537 = vsel %vm499, %v471, 0
  %v540 = vsel %vm499, %v472, 0
  %v543 = vsel %vm499, %v473, 0
  %v546 = vsel %vm499, %v474, 0
  %v549 = vsel %vm499, %v475, 0
  %v552 = vsel %vm499, %v476, 0
  %v555 = vsel %vm499, %v477, 0
  %v558 = vsel %vm499, %v478, 0
  %560 = vmatprep.subr.bf16.mxu0 0
  %561 = vmatpush1.bf16.msra.mxu0 %v495
  %562 = vmatprep.subr.bf16.mxu0 0
  %563 = vmatpush1.bf16.msra.mxu0 %v496
  %564 = vmatprep.subr.bf16.mxu0 0
  %565 = vmatpush1.bf16.msra.mxu0 0
  %566 = vmatprep.subr.bf16.mxu0 0
  %567 = vmatpush1.bf16.msra.mxu0 0
  %568 = vmatprep.subr.bf16.mxu0 0
  %569 = vmatpush1.bf16.msra.mxu0 0
  %570 = vmatprep.subr.bf16.mxu0 0
  %571 = vmatpush1.bf16.msra.mxu0 0
  %572 = vmatprep.subr.bf16.mxu0 0
  %573 = vmatpush1.bf16.msra.mxu0 0
  %574 = vmatprep.subr.bf16.mxu0 0
  %575 = vmatpush1.bf16.msra.mxu0 0
  %576 = vmatprep.subr.bf16.mxu0 0
  %577 = vmatpush1.bf16.msra.mxu0 0
  %578 = vmatprep.subr.bf16.mxu0 0
  %579 = vmatpush1.bf16.msra.mxu0 0
  %580 = vmatprep.subr.bf16.mxu0 0
  %581 = vmatpush1.bf16.msra.mxu0 0
  %582 = vmatprep.subr.bf16.mxu0 0
  %583 = vmatpush1.bf16.msra.mxu0 0
  %584 = vmatprep.subr.bf16.mxu0 0
  %585 = vmatpush1.bf16.msra.mxu0 0
  %586 = vmatprep.subr.bf16.mxu0 0
  %587 = vmatpush1.bf16.msra.mxu0 0
  %588 = vmatprep.subr.bf16.mxu0 0
  %589 = vmatpush1.bf16.msra.mxu0 0
  %590 = vmatprep.subr.bf16.mxu0 0
  %591 = vmatpush1.bf16.msra.mxu0 0
  %592 = vmatprep.mubr.bf16.mxu0 0
  %593 = vmatmul.mubr.bf16.gmra.mrb[0].mxu0 %v501
  %v594 = vpop.f32.mrb[0].mxu0
  %v595 = vadd.f32 %v486, %v594
  %v596 = vpop.f32.mrb[0].mxu0
  %v597 = vpop.f32.mrb[0].mxu0
  %v598 = vadd.f32 %v486, %v597
  %v599 = vpop.f32.mrb[0].mxu0
  %600 = vmatprep.mubr.bf16.mxu0 0
  %601 = vmatmul.mubr.bf16.gmra.mrb[0].mxu0 %v504
  %v602 = vpop.f32.mrb[0].mxu0
  %v603 = vadd.f32 %v486, %v602
  %v604 = vpop.f32.mrb[0].mxu0
  %v605 = vpop.f32.mrb[0].mxu0
  %v606 = vadd.f32 %v486, %v605
  %v607 = vpop.f32.mrb[0].mxu0
  %608 = vmatprep.mubr.bf16.mxu0 0
  %609 = vmatmul.mubr.bf16.gmra.mrb[0].mxu0 %v507
  %v610 = vpop.f32.mrb[0].mxu0
  %v611 = vadd.f32 %v486, %v610
  %v612 = vpop.f32.mrb[0].mxu0
  %v613 = vpop.f32.mrb[0].mxu0
  %v614 = vadd.f32 %v486, %v613
  %v615 = vpop.f32.mrb[0].mxu0
  %616 = vmatprep.mubr.bf16.mxu0 0
  %617 = vmatmul.mubr.bf16.gmra.mrb[0].mxu0 %v510
  %v618 = vpop.f32.mrb[0].mxu0
  %v619 = vadd.f32 %v486, %v618
  %v620 = vpop.f32.mrb[0].mxu0
  %v621 = vpop.f32.mrb[0].mxu0
  %v622 = vadd.f32 %v486, %v621
  %v623 = vpop.f32.mrb[0].mxu0
  %624 = vmatprep.mubr.bf16.mxu0 0
  %625 = vmatmul.mubr.bf16.gmra.mrb[0].mxu0 %v513
  %v626 = vpop.f32.mrb[0].mxu0
  %v627 = vadd.f32 %v486, %v626
  %v628 = vpop.f32.mrb[0].mxu0
  %v629 = vpop.f32.mrb[0].mxu0
  %v630 = vadd.f32 %v486, %v629
  %v631 = vpop.f32.mrb[0].mxu0
  %632 = vmatprep.mubr.bf16.mxu0 0
  %633 = vmatmul.mubr.bf16.gmra.mrb[0].mxu0 %v516
  %v634 = vpop.f32.mrb[0].mxu0
  %v635 = vadd.f32 %v486, %v634
  %v636 = vpop.f32.mrb[0].mxu0
  %v637 = vpop.f32.mrb[0].mxu0
  %v638 = vadd.f32 %v486, %v637
  %v639 = vpop.f32.mrb[0].mxu0
  %640 = vmatprep.mubr.bf16.mxu0 0
  %641 = vmatmul.mubr.bf16.gmra.mrb[0].mxu0 %v519
  %v642 = vpop.f32.mrb[0].mxu0
  %v643 = vadd.f32 %v486, %v642
  %v644 = vpop.f32.mrb[0].mxu0
  %v645 = vpop.f32.mrb[0].mxu0
  %v646 = vadd.f32 %v486, %v645
  %v647 = vpop.f32.mrb[0].mxu0
  %648 = vmatprep.mubr.bf16.mxu0 0
  %649 = vmatmul.mubr.bf16.gmra.mrb[0].mxu0 %v522
  %v650 = vpop.f32.mrb[0].mxu0
  %v651 = vadd.f32 %v486, %v650
  %v652 = vpop.f32.mrb[0].mxu0
  %v653 = vpop.f32.mrb[0].mxu0
  %v654 = vadd.f32 %v486, %v653
  %v655 = vpop.f32.mrb[0].mxu0
  %656 = vmatprep.mubr.bf16.mxu0 0
  %657 = vmatmul.mubr.bf16.gmra.mrb[0].mxu0 %v525
  %v658 = vpop.f32.mrb[0].mxu0
  %v659 = vadd.f32 %v486, %v658
  %v660 = vpop.f32.mrb[0].mxu0
  %v661 = vpop.f32.mrb[0].mxu0
  %v662 = vadd.f32 %v486, %v661
  %v663 = vpop.f32.mrb[0].mxu0
  %664 = vmatprep.mubr.bf16.mxu0 0
  %665 = vmatmul.mubr.bf16.gmra.mrb[0].mxu0 %v528
  %v666 = vpop.f32.mrb[0].mxu0
  %v667 = vadd.f32 %v486, %v666
  %v668 = vpop.f32.mrb[0].mxu0
  %v669 = vpop.f32.mrb[0].mxu0
  %v670 = vadd.f32 %v486, %v669
  %v671 = vpop.f32.mrb[0].mxu0
  %672 = vmatprep.mubr.bf16.mxu0 0
  %673 = vmatmul.mubr.bf16.gmra.mrb[0].mxu0 %v531
  %v674 = vpop.f32.mrb[0].mxu0
  %v675 = vadd.f32 %v486, %v674
  %v676 = vpop.f32.mrb[0].mxu0
  %v677 = vpop.f32.mrb[0].mxu0
  %v678 = vadd.f32 %v486, %v677
  %v679 = vpop.f32.mrb[0].mxu0
  %680 = vmatprep.mubr.bf16.mxu0 0
  %681 = vmatmul.mubr.bf16.gmra.mrb[0].mxu0 %v534
  %v682 = vpop.f32.mrb[0].mxu0
  %v683 = vadd.f32 %v486, %v682
  %v684 = vpop.f32.mrb[0].mxu0
  %v685 = vpop.f32.mrb[0].mxu0
  %v686 = vadd.f32 %v486, %v685
  %v687 = vpop.f32.mrb[0].mxu0
  %688 = vmatprep.mubr.bf16.mxu0 0
  %689 = vmatmul.mubr.bf16.gmra.mrb[0].mxu0 %v537
  %v690 = vpop.f32.mrb[0].mxu0
  %v691 = vadd.f32 %v486, %v690
  %v692 = vpop.f32.mrb[0].mxu0
  %v693 = vpop.f32.mrb[0].mxu0
  %v694 = vadd.f32 %v486, %v693
  %v695 = vpop.f32.mrb[0].mxu0
  %696 = vmatprep.mubr.bf16.mxu0 0
  %697 = vmatmul.mubr.bf16.gmra.mrb[0].mxu0 %v540
  %v698 = vpop.f32.mrb[0].mxu0
  %v699 = vadd.f32 %v486, %v698
  %v700 = vpop.f32.mrb[0].mxu0
  %v701 = vpop.f32.mrb[0].mxu0
  %v702 = vadd.f32 %v486, %v701
  %v703 = vpop.f32.mrb[0].mxu0
  %704 = vmatprep.mubr.bf16.mxu0 0
  %705 = vmatmul.mubr.bf16.gmra.mrb[0].mxu0 %v543
  %v706 = vpop.f32.mrb[0].mxu0
  %v707 = vadd.f32 %v486, %v706
  %v708 = vpop.f32.mrb[0].mxu0
  %v709 = vpop.f32.mrb[0].mxu0
  %v710 = vadd.f32 %v486, %v709
  %v711 = vpop.f32.mrb[0].mxu0
  %712 = vmatprep.mubr.bf16.mxu0 0
  %713 = vmatmul.mubr.bf16.gmra.mrb[0].mxu0 %v546
  %v714 = vpop.f32.mrb[0].mxu0
  %v715 = vadd.f32 %v486, %v714
  %v716 = vpop.f32.mrb[0].mxu0
  %v717 = vpop.f32.mrb[0].mxu0
  %v718 = vadd.f32 %v486, %v717
  %v719 = vpop.f32.mrb[0].mxu0
  %720 = vmatprep.mubr.bf16.mxu0 0
  %721 = vmatmul.mubr.bf16.gmra.mrb[0].mxu0 %v549
  %v722 = vpop.f32.mrb[0].mxu0
  %v723 = vadd.f32 %v486, %v722
  %v724 = vpop.f32.mrb[0].mxu0
  %v725 = vpop.f32.mrb[0].mxu0
  %v726 = vadd.f32 %v486, %v725
  %v727 = vpop.f32.mrb[0].mxu0
  %728 = vmatprep.mubr.bf16.mxu0 0
  %729 = vmatmul.mubr.bf16.gmra.mrb[0].mxu0 %v552
  %v730 = vpop.f32.mrb[0].mxu0
  %v731 = vadd.f32 %v486, %v730
  %v732 = vpop.f32.mrb[0].mxu0
  %v733 = vpop.f32.mrb[0].mxu0
  %v734 = vadd.f32 %v486, %v733
  %v735 = vpop.f32.mrb[0].mxu0
  %736 = vmatprep.mubr.bf16.mxu0 0
  %737 = vmatmul.mubr.bf16.gmra.mrb[0].mxu0 %v555
  %v738 = vpop.f32.mrb[0].mxu0
  %v739 = vadd.f32 %v486, %v738
  %v740 = vpop.f32.mrb[0].mxu0
  %v741 = vpop.f32.mrb[0].mxu0
  %v742 = vadd.f32 %v486, %v741
  %v743 = vpop.f32.mrb[0].mxu0
  %744 = vmatprep.mubr.bf16.mxu0 0
  %745 = vmatmul.mubr.bf16.gmra.mrb[0].mxu0 %v558
  %v746 = vpop.f32.mrb[0].mxu0
  %v747 = vadd.f32 %v486, %v746
  %v748 = vpop.f32.mrb[0].mxu0
  %v749 = vpop.f32.mrb[0].mxu0
  %v750 = vadd.f32 %v486, %v749
  %v751 = vpop.f32.mrb[0].mxu0
  %752 = vdwg.mxu0
  %v753 = vsel %vm499, %v595, 0.0
  %754 = vadd.xlane.f32.xlu0 %v753
  %v755 = vpop.xlane.xlu0 %754
  %v756 = vsel %vm499, %v598, 0.0
  %757 = vadd.xlane.f32.xlu0 %v756
  %v758 = vpop.xlane.xlu0 %757
  %v759 = vsel %vm499, %v603, 0.0
  %760 = vadd.xlane.f32.xlu0 %v759
  %v761 = vpop.xlane.xlu0 %760
  %v762 = vsel %vm499, %v606, 0.0
  %763 = vadd.xlane.f32.xlu0 %v762
  %v764 = vpop.xlane.xlu0 %763
  %v765 = vsel %vm499, %v611, 0.0
  %766 = vadd.xlane.f32.xlu0 %v765
  %v767 = vpop.xlane.xlu0 %766
  %v768 = vsel %vm499, %v614, 0.0
  %769 = vadd.xlane.f32.xlu0 %v768
  %v770 = vpop.xlane.xlu0 %769
  %v771 = vsel %vm499, %v619, 0.0
  %772 = vadd.xlane.f32.xlu0 %v771
  %v773 = vpop.xlane.xlu0 %772
  %v774 = vsel %vm499, %v622, 0.0
  %775 = vadd.xlane.f32.xlu0 %v774
  %v776 = vpop.xlane.xlu0 %775
  %v777 = vsel %vm499, %v627, 0.0
  %778 = vadd.xlane.f32.xlu0 %v777
  %v779 = vpop.xlane.xlu0 %778
  %v780 = vsel %vm499, %v630, 0.0
  %781 = vadd.xlane.f32.xlu0 %v780
  %v782 = vpop.xlane.xlu0 %781
  %v783 = vsel %vm499, %v635, 0.0
  %784 = vadd.xlane.f32.xlu0 %v783
  %v785 = vpop.xlane.xlu0 %784
  %v786 = vsel %vm499, %v638, 0.0
  %787 = vadd.xlane.f32.xlu0 %v786
  %v788 = vpop.xlane.xlu0 %787
  %v789 = vsel %vm499, %v643, 0.0
  %790 = vadd.xlane.f32.xlu0 %v789
  %v791 = vpop.xlane.xlu0 %790
  %v792 = vsel %vm499, %v646, 0.0
  %793 = vadd.xlane.f32.xlu0 %v792
  %v794 = vpop.xlane.xlu0 %793
  %v795 = vsel %vm499, %v651, 0.0
  %796 = vadd.xlane.f32.xlu0 %v795
  %v797 = vpop.xlane.xlu0 %796
  %v798 = vsel %vm499, %v654, 0.0
  %799 = vadd.xlane.f32.xlu0 %v798
  %v800 = vpop.xlane.xlu0 %799
  %v801 = vsel %vm499, %v659, 0.0
  %802 = vadd.xlane.f32.xlu0 %v801
  %v803 = vpop.xlane.xlu0 %802
  %v804 = vsel %vm499, %v662, 0.0
  %805 = vadd.xlane.f32.xlu0 %v804
  %v806 = vpop.xlane.xlu0 %805
  %v807 = vsel %vm499, %v667, 0.0
  %808 = vadd.xlane.f32.xlu0 %v807
  %v809 = vpop.xlane.xlu0 %808
  %v810 = vsel %vm499, %v670, 0.0
  %811 = vadd.xlane.f32.xlu0 %v810
  %v812 = vpop.xlane.xlu0 %811
  %v813 = vsel %vm499, %v675, 0.0
  %814 = vadd.xlane.f32.xlu0 %v813
  %v815 = vpop.xlane.xlu0 %814
  %v816 = vsel %vm499, %v678, 0.0
  %817 = vadd.xlane.f32.xlu0 %v816
  %v818 = vpop.xlane.xlu0 %817
  %v819 = vsel %vm499, %v683, 0.0
  %820 = vadd.xlane.f32.xlu0 %v819
  %v821 = vpop.xlane.xlu0 %820
  %v822 = vsel %vm499, %v686, 0.0
  %823 = vadd.xlane.f32.xlu0 %v822
  %v824 = vpop.xlane.xlu0 %823
  %v825 = vsel %vm499, %v691, 0.0
  %826 = vadd.xlane.f32.xlu0 %v825
  %v827 = vpop.xlane.xlu0 %826
  %v828 = vsel %vm499, %v694, 0.0
  %829 = vadd.xlane.f32.xlu0 %v828
  %v830 = vpop.xlane.xlu0 %829
  %v831 = vsel %vm499, %v699, 0.0
  %832 = vadd.xlane.f32.xlu0 %v831
  %v833 = vpop.xlane.xlu0 %832
  %v834 = vsel %vm499, %v702, 0.0
  %835 = vadd.xlane.f32.xlu0 %v834
  %v836 = vpop.xlane.xlu0 %835
  %v837 = vsel %vm499, %v707, 0.0
  %838 = vadd.xlane.f32.xlu0 %v837
  %v839 = vpop.xlane.xlu0 %838
  %v840 = vsel %vm499, %v710, 0.0
  %841 = vadd.xlane.f32.xlu0 %v840
  %v842 = vpop.xlane.xlu0 %841
  %v843 = vsel %vm499, %v715, 0.0
  %844 = vadd.xlane.f32.xlu0 %v843
  %v845 = vpop.xlane.xlu0 %844
  %v846 = vsel %vm499, %v718, 0.0
  %847 = vadd.xlane.f32.xlu0 %v846
  %v848 = vpop.xlane.xlu0 %847
  %v849 = vsel %vm499, %v723, 0.0
  %850 = vadd.xlane.f32.xlu0 %v849
  %v851 = vpop.xlane.xlu0 %850
  %v852 = vsel %vm499, %v726, 0.0
  %853 = vadd.xlane.f32.xlu0 %v852
  %v854 = vpop.xlane.xlu0 %853
  %v855 = vsel %vm499, %v731, 0.0
  %856 = vadd.xlane.f32.xlu0 %v855
  %v857 = vpop.xlane.xlu0 %856
  %v858 = vsel %vm499, %v734, 0.0
  %859 = vadd.xlane.f32.xlu0 %v858
  %v860 = vpop.xlane.xlu0 %859
  %v861 = vsel %vm499, %v739, 0.0
  %862 = vadd.xlane.f32.xlu0 %v861
  %v863 = vpop.xlane.xlu0 %862
  %v864 = vsel %vm499, %v742, 0.0
  %865 = vadd.xlane.f32.xlu0 %v864
  %v866 = vpop.xlane.xlu0 %865
  %v867 = vsel %vm499, %v747, 0.0
  %868 = vadd.xlane.f32.xlu0 %v867
  %v869 = vpop.xlane.xlu0 %868
  %v870 = vsel %vm499, %v750, 0.0
  %871 = vadd.xlane.f32.xlu0 %v870
  %v872 = vpop.xlane.xlu0 %871
  %v873 = vrcp.pop 32.0
  %v874 = vmul.f32 %v755, %v873
  %v875 = vmul.f32 %v758, %v873
  %v876 = vmul.f32 %v761, %v873
  %v877 = vmul.f32 %v764, %v873
  %v878 = vmul.f32 %v767, %v873
  %v879 = vmul.f32 %v770, %v873
  %v880 = vmul.f32 %v773, %v873
  %v881 = vmul.f32 %v776, %v873
  %v882 = vmul.f32 %v779, %v873
  %v883 = vmul.f32 %v782, %v873
  %v884 = vmul.f32 %v785, %v873
  %v885 = vmul.f32 %v788, %v873
  %v886 = vmul.f32 %v791, %v873
  %v887 = vmul.f32 %v794, %v873
  %v888 = vmul.f32 %v797, %v873
  %v889 = vmul.f32 %v800, %v873
  %v890 = vmul.f32 %v803, %v873
  %v891 = vmul.f32 %v806, %v873
  %v892 = vmul.f32 %v809, %v873
  %v893 = vmul.f32 %v812, %v873
  %v894 = vmul.f32 %v815, %v873
  %v895 = vmul.f32 %v818, %v873
  %v896 = vmul.f32 %v821, %v873
  %v897 = vmul.f32 %v824, %v873
  %v898 = vmul.f32 %v827, %v873
  %v899 = vmul.f32 %v830, %v873
  %v900 = vmul.f32 %v833, %v873
  %v901 = vmul.f32 %v836, %v873
  %v902 = vmul.f32 %v839, %v873
  %v903 = vmul.f32 %v842, %v873
  %v904 = vmul.f32 %v845, %v873
  %v905 = vmul.f32 %v848, %v873
  %v906 = vmul.f32 %v851, %v873
  %v907 = vmul.f32 %v854, %v873
  %v908 = vmul.f32 %v857, %v873
  %v909 = vmul.f32 %v860, %v873
  %v910 = vmul.f32 %v863, %v873
  %v911 = vmul.f32 %v866, %v873
  %v912 = vmul.f32 %v869, %v873
  %v913 = vmul.f32 %v872, %v873
  %v914 = vmul.f32 %v595, %v595
  %v915 = vmul.f32 %v598, %v598
  %v916 = vmul.f32 %v603, %v603
  %v917 = vmul.f32 %v606, %v606
  %v918 = vmul.f32 %v611, %v611
  %v919 = vmul.f32 %v614, %v614
  %v920 = vmul.f32 %v619, %v619
  %v921 = vmul.f32 %v622, %v622
  %v922 = vmul.f32 %v627, %v627
  %v923 = vmul.f32 %v630, %v630
  %v924 = vmul.f32 %v635, %v635
  %v925 = vmul.f32 %v638, %v638
  %v926 = vmul.f32 %v643, %v643
  %v927 = vmul.f32 %v646, %v646
  %v928 = vmul.f32 %v651, %v651
  %v929 = vmul.f32 %v654, %v654
  %v930 = vmul.f32 %v659, %v659
  %v931 = vmul.f32 %v662, %v662
  %v932 = vmul.f32 %v667, %v667
  %v933 = vmul.f32 %v670, %v670
  %v934 = vmul.f32 %v675, %v675
  %v935 = vmul.f32 %v678, %v678
  %v936 = vmul.f32 %v683, %v683
  %v937 = vmul.f32 %v686, %v686
  %v938 = vmul.f32 %v691, %v691
  %v939 = vmul.f32 %v694, %v694
  %v940 = vmul.f32 %v699, %v699
  %v941 = vmul.f32 %v702, %v702
  %v942 = vmul.f32 %v707, %v707
  %v943 = vmul.f32 %v710, %v710
  %v944 = vmul.f32 %v715, %v715
  %v945 = vmul.f32 %v718, %v718
  %v946 = vmul.f32 %v723, %v723
  %v947 = vmul.f32 %v726, %v726
  %v948 = vmul.f32 %v731, %v731
  %v949 = vmul.f32 %v734, %v734
  %v950 = vmul.f32 %v739, %v739
  %v951 = vmul.f32 %v742, %v742
  %v952 = vmul.f32 %v747, %v747
  %v953 = vmul.f32 %v750, %v750
  %v954 = vsel %vm499, %v914, 0.0
  %955 = vadd.xlane.f32.xlu0 %v954
  %v956 = vpop.xlane.xlu0 %955
  %v957 = vsel %vm499, %v915, 0.0
  %958 = vadd.xlane.f32.xlu0 %v957
  %v959 = vpop.xlane.xlu0 %958
  %v960 = vsel %vm499, %v916, 0.0
  %961 = vadd.xlane.f32.xlu0 %v960
  %v962 = vpop.xlane.xlu0 %961
  %v963 = vsel %vm499, %v917, 0.0
  %964 = vadd.xlane.f32.xlu0 %v963
  %v965 = vpop.xlane.xlu0 %964
  %v966 = vsel %vm499, %v918, 0.0
  %967 = vadd.xlane.f32.xlu0 %v966
  %v968 = vpop.xlane.xlu0 %967
  %v969 = vsel %vm499, %v919, 0.0
  %970 = vadd.xlane.f32.xlu0 %v969
  %v971 = vpop.xlane.xlu0 %970
  %v972 = vsel %vm499, %v920, 0.0
  %973 = vadd.xlane.f32.xlu0 %v972
  %v974 = vpop.xlane.xlu0 %973
  %v975 = vsel %vm499, %v921, 0.0
  %976 = vadd.xlane.f32.xlu0 %v975
  %v977 = vpop.xlane.xlu0 %976
  %v978 = vsel %vm499, %v922, 0.0
  %979 = vadd.xlane.f32.xlu0 %v978
  %v980 = vpop.xlane.xlu0 %979
  %v981 = vsel %vm499, %v923, 0.0
  %982 = vadd.xlane.f32.xlu0 %v981
  %v983 = vpop.xlane.xlu0 %982
  %v984 = vsel %vm499, %v924, 0.0
  %985 = vadd.xlane.f32.xlu0 %v984
  %v986 = vpop.xlane.xlu0 %985
  %v987 = vsel %vm499, %v925, 0.0
  %988 = vadd.xlane.f32.xlu0 %v987
  %v989 = vpop.xlane.xlu0 %988
  %v990 = vsel %vm499, %v926, 0.0
  %991 = vadd.xlane.f32.xlu0 %v990
  %v992 = vpop.xlane.xlu0 %991
  %v993 = vsel %vm499, %v927, 0.0
  %994 = vadd.xlane.f32.xlu0 %v993
  %v995 = vpop.xlane.xlu0 %994
  %v996 = vsel %vm499, %v928, 0.0
  %997 = vadd.xlane.f32.xlu0 %v996
  %v998 = vpop.xlane.xlu0 %997
  %v999 = vsel %vm499, %v929, 0.0
  %1000 = vadd.xlane.f32.xlu0 %v999
  %v1001 = vpop.xlane.xlu0 %1000
  %v1002 = vsel %vm499, %v930, 0.0
  %1003 = vadd.xlane.f32.xlu0 %v1002
  %v1004 = vpop.xlane.xlu0 %1003
  %v1005 = vsel %vm499, %v931, 0.0
  %1006 = vadd.xlane.f32.xlu0 %v1005
  %v1007 = vpop.xlane.xlu0 %1006
  %v1008 = vsel %vm499, %v932, 0.0
  %1009 = vadd.xlane.f32.xlu0 %v1008
  %v1010 = vpop.xlane.xlu0 %1009
  %v1011 = vsel %vm499, %v933, 0.0
  %1012 = vadd.xlane.f32.xlu0 %v1011
  %v1013 = vpop.xlane.xlu0 %1012
  %v1014 = vsel %vm499, %v934, 0.0
  %1015 = vadd.xlane.f32.xlu0 %v1014
  %v1016 = vpop.xlane.xlu0 %1015
  %v1017 = vsel %vm499, %v935, 0.0
  %1018 = vadd.xlane.f32.xlu0 %v1017
  %v1019 = vpop.xlane.xlu0 %1018
  %v1020 = vsel %vm499, %v936, 0.0
  %1021 = vadd.xlane.f32.xlu0 %v1020
  %v1022 = vpop.xlane.xlu0 %1021
  %v1023 = vsel %vm499, %v937, 0.0
  %1024 = vadd.xlane.f32.xlu0 %v1023
  %v1025 = vpop.xlane.xlu0 %1024
  %v1026 = vsel %vm499, %v938, 0.0
  %1027 = vadd.xlane.f32.xlu0 %v1026
  %v1028 = vpop.xlane.xlu0 %1027
  %v1029 = vsel %vm499, %v939, 0.0
  %1030 = vadd.xlane.f32.xlu0 %v1029
  %v1031 = vpop.xlane.xlu0 %1030
  %v1032 = vsel %vm499, %v940, 0.0
  %1033 = vadd.xlane.f32.xlu0 %v1032
  %v1034 = vpop.xlane.xlu0 %1033
  %v1035 = vsel %vm499, %v941, 0.0
  %1036 = vadd.xlane.f32.xlu0 %v1035
  %v1037 = vpop.xlane.xlu0 %1036
  %v1038 = vsel %vm499, %v942, 0.0
  %1039 = vadd.xlane.f32.xlu0 %v1038
  %v1040 = vpop.xlane.xlu0 %1039
  %v1041 = vsel %vm499, %v943, 0.0
  %1042 = vadd.xlane.f32.xlu0 %v1041
  %v1043 = vpop.xlane.xlu0 %1042
  %v1044 = vsel %vm499, %v944, 0.0
  %1045 = vadd.xlane.f32.xlu0 %v1044
  %v1046 = vpop.xlane.xlu0 %1045
  %v1047 = vsel %vm499, %v945, 0.0
  %1048 = vadd.xlane.f32.xlu0 %v1047
  %v1049 = vpop.xlane.xlu0 %1048
  %v1050 = vsel %vm499, %v946, 0.0
  %1051 = vadd.xlane.f32.xlu0 %v1050
  %v1052 = vpop.xlane.xlu0 %1051
  %v1053 = vsel %vm499, %v947, 0.0
  %1054 = vadd.xlane.f32.xlu0 %v1053
  %v1055 = vpop.xlane.xlu0 %1054
  %v1056 = vsel %vm499, %v948, 0.0
  %1057 = vadd.xlane.f32.xlu0 %v1056
  %v1058 = vpop.xlane.xlu0 %1057
  %v1059 = vsel %vm499, %v949, 0.0
  %1060 = vadd.xlane.f32.xlu0 %v1059
  %v1061 = vpop.xlane.xlu0 %1060
  %v1062 = vsel %vm499, %v950, 0.0
  %1063 = vadd.xlane.f32.xlu0 %v1062
  %v1064 = vpop.xlane.xlu0 %1063
  %v1065 = vsel %vm499, %v951, 0.0
  %1066 = vadd.xlane.f32.xlu0 %v1065
  %v1067 = vpop.xlane.xlu0 %1066
  %v1068 = vsel %vm499, %v952, 0.0
  %1069 = vadd.xlane.f32.xlu0 %v1068
  %v1070 = vpop.xlane.xlu0 %1069
  %v1071 = vsel %vm499, %v953, 0.0
  %1072 = vadd.xlane.f32.xlu0 %v1071
  %v1073 = vpop.xlane.xlu0 %1072
  %v1074 = vmul.f32 %v956, %v873
  %v1075 = vmul.f32 %v959, %v873
  %v1076 = vmul.f32 %v962, %v873
  %v1077 = vmul.f32 %v965, %v873
  %v1078 = vmul.f32 %v968, %v873
  %v1079 = vmul.f32 %v971, %v873
  %v1080 = vmul.f32 %v974, %v873
  %v1081 = vmul.f32 %v977, %v873
  %v1082 = vmul.f32 %v980, %v873
  %v1083 = vmul.f32 %v983, %v873
  %v1084 = vmul.f32 %v986, %v873
  %v1085 = vmul.f32 %v989, %v873
  %v1086 = vmul.f32 %v992, %v873
  %v1087 = vmul.f32 %v995, %v873
  %v1088 = vmul.f32 %v998, %v873
  %v1089 = vmul.f32 %v1001, %v873
  %v1090 = vmul.f32 %v1004, %v873
  %v1091 = vmul.f32 %v1007, %v873
  %v1092 = vmul.f32 %v1010, %v873
  %v1093 = vmul.f32 %v1013, %v873
  %v1094 = vmul.f32 %v1016, %v873
  %v1095 = vmul.f32 %v1019, %v873
  %v1096 = vmul.f32 %v1022, %v873
  %v1097 = vmul.f32 %v1025, %v873
  %v1098 = vmul.f32 %v1028, %v873
  %v1099 = vmul.f32 %v1031, %v873
  %v1100 = vmul.f32 %v1034, %v873
  %v1101 = vmul.f32 %v1037, %v873
  %v1102 = vmul.f32 %v1040, %v873
  %v1103 = vmul.f32 %v1043, %v873
  %v1104 = vmul.f32 %v1046, %v873
  %v1105 = vmul.f32 %v1049, %v873
  %v1106 = vmul.f32 %v1052, %v873
  %v1107 = vmul.f32 %v1055, %v873
  %v1108 = vmul.f32 %v1058, %v873
  %v1109 = vmul.f32 %v1061, %v873
  %v1110 = vmul.f32 %v1064, %v873
  %v1111 = vmul.f32 %v1067, %v873
  %v1112 = vmul.f32 %v1070, %v873
  %v1113 = vmul.f32 %v1073, %v873
  %v1114 = vmul.f32 %v874, %v874
  %v1115 = vmul.f32 %v875, %v875
  %v1116 = vmul.f32 %v876, %v876
  %v1117 = vmul.f32 %v877, %v877
  %v1118 = vmul.f32 %v878, %v878
  %v1119 = vmul.f32 %v879, %v879
  %v1120 = vmul.f32 %v880, %v880
  %v1121 = vmul.f32 %v881, %v881
  %v1122 = vmul.f32 %v882, %v882
  %v1123 = vmul.f32 %v883, %v883
  %v1124 = vmul.f32 %v884, %v884
  %v1125 = vmul.f32 %v885, %v885
  %v1126 = vmul.f32 %v886, %v886
  %v1127 = vmul.f32 %v887, %v887
  %v1128 = vmul.f32 %v888, %v888
  %v1129 = vmul.f32 %v889, %v889
  %v1130 = vmul.f32 %v890, %v890
  %v1131 = vmul.f32 %v891, %v891
  %v1132 = vmul.f32 %v892, %v892
  %v1133 = vmul.f32 %v893, %v893
  %v1134 = vmul.f32 %v894, %v894
  %v1135 = vmul.f32 %v895, %v895
  %v1136 = vmul.f32 %v896, %v896
  %v1137 = vmul.f32 %v897, %v897
  %v1138 = vmul.f32 %v898, %v898
  %v1139 = vmul.f32 %v899, %v899
  %v1140 = vmul.f32 %v900, %v900
  %v1141 = vmul.f32 %v901, %v901
  %v1142 = vmul.f32 %v902, %v902
  %v1143 = vmul.f32 %v903, %v903
  %v1144 = vmul.f32 %v904, %v904
  %v1145 = vmul.f32 %v905, %v905
  %v1146 = vmul.f32 %v906, %v906
  %v1147 = vmul.f32 %v907, %v907
  %v1148 = vmul.f32 %v908, %v908
  %v1149 = vmul.f32 %v909, %v909
  %v1150 = vmul.f32 %v910, %v910
  %v1151 = vmul.f32 %v911, %v911
  %v1152 = vmul.f32 %v912, %v912
  %v1153 = vmul.f32 %v913, %v913
  %v1154 = vsub.f32 %v1074, %v1114
  %v1155 = vsub.f32 %v1075, %v1115
  %v1156 = vsub.f32 %v1076, %v1116
  %v1157 = vsub.f32 %v1077, %v1117
  %v1158 = vsub.f32 %v1078, %v1118
  %v1159 = vsub.f32 %v1079, %v1119
  %v1160 = vsub.f32 %v1080, %v1120
  %v1161 = vsub.f32 %v1081, %v1121
  %v1162 = vsub.f32 %v1082, %v1122
  %v1163 = vsub.f32 %v1083, %v1123
  %v1164 = vsub.f32 %v1084, %v1124
  %v1165 = vsub.f32 %v1085, %v1125
  %v1166 = vsub.f32 %v1086, %v1126
  %v1167 = vsub.f32 %v1087, %v1127
  %v1168 = vsub.f32 %v1088, %v1128
  %v1169 = vsub.f32 %v1089, %v1129
  %v1170 = vsub.f32 %v1090, %v1130
  %v1171 = vsub.f32 %v1091, %v1131
  %v1172 = vsub.f32 %v1092, %v1132
  %v1173 = vsub.f32 %v1093, %v1133
  %v1174 = vsub.f32 %v1094, %v1134
  %v1175 = vsub.f32 %v1095, %v1135
  %v1176 = vsub.f32 %v1096, %v1136
  %v1177 = vsub.f32 %v1097, %v1137
  %v1178 = vsub.f32 %v1098, %v1138
  %v1179 = vsub.f32 %v1099, %v1139
  %v1180 = vsub.f32 %v1100, %v1140
  %v1181 = vsub.f32 %v1101, %v1141
  %v1182 = vsub.f32 %v1102, %v1142
  %v1183 = vsub.f32 %v1103, %v1143
  %v1184 = vsub.f32 %v1104, %v1144
  %v1185 = vsub.f32 %v1105, %v1145
  %v1186 = vsub.f32 %v1106, %v1146
  %v1187 = vsub.f32 %v1107, %v1147
  %v1188 = vsub.f32 %v1108, %v1148
  %v1189 = vsub.f32 %v1109, %v1149
  %v1190 = vsub.f32 %v1110, %v1150
  %v1191 = vsub.f32 %v1111, %v1151
  %v1192 = vsub.f32 %v1112, %v1152
  %v1193 = vsub.f32 %v1113, %v1153
  %v1194 = vsub.f32 %v595, %v874
  %v1195 = vsub.f32 %v598, %v875
  %v1196 = vsub.f32 %v603, %v876
  %v1197 = vsub.f32 %v606, %v877
  %v1198 = vsub.f32 %v611, %v878
  %v1199 = vsub.f32 %v614, %v879
  %v1200 = vsub.f32 %v619, %v880
  %v1201 = vsub.f32 %v622, %v881
  %v1202 = vsub.f32 %v627, %v882
  %v1203 = vsub.f32 %v630, %v883
  %v1204 = vsub.f32 %v635, %v884
  %v1205 = vsub.f32 %v638, %v885
  %v1206 = vsub.f32 %v643, %v886
  %v1207 = vsub.f32 %v646, %v887
  %v1208 = vsub.f32 %v651, %v888
  %v1209 = vsub.f32 %v654, %v889
  %v1210 = vsub.f32 %v659, %v890
  %v1211 = vsub.f32 %v662, %v891
  %v1212 = vsub.f32 %v667, %v892
  %v1213 = vsub.f32 %v670, %v893
  %v1214 = vsub.f32 %v675, %v894
  %v1215 = vsub.f32 %v678, %v895
  %v1216 = vsub.f32 %v683, %v896
  %v1217 = vsub.f32 %v686, %v897
  %v1218 = vsub.f32 %v691, %v898
  %v1219 = vsub.f32 %v694, %v899
  %v1220 = vsub.f32 %v699, %v900
  %v1221 = vsub.f32 %v702, %v901
  %v1222 = vsub.f32 %v707, %v902
  %v1223 = vsub.f32 %v710, %v903
  %v1224 = vsub.f32 %v715, %v904
  %v1225 = vsub.f32 %v718, %v905
  %v1226 = vsub.f32 %v723, %v906
  %v1227 = vsub.f32 %v726, %v907
  %v1228 = vsub.f32 %v731, %v908
  %v1229 = vsub.f32 %v734, %v909
  %v1230 = vsub.f32 %v739, %v910
  %v1231 = vsub.f32 %v742, %v911
  %v1232 = vsub.f32 %v747, %v912
  %v1233 = vsub.f32 %v750, %v913
  %v1234 = vadd.f32 %v1154, 1e-05
  %v1235 = vadd.f32 %v1155, 1e-05
  %v1236 = vadd.f32 %v1156, 1e-05
  %v1237 = vadd.f32 %v1157, 1e-05
  %v1238 = vadd.f32 %v1158, 1e-05
  %v1239 = vadd.f32 %v1159, 1e-05
  %v1240 = vadd.f32 %v1160, 1e-05
  %v1241 = vadd.f32 %v1161, 1e-05
  %v1242 = vadd.f32 %v1162, 1e-05
  %v1243 = vadd.f32 %v1163, 1e-05
  %v1244 = vadd.f32 %v1164, 1e-05
  %v1245 = vadd.f32 %v1165, 1e-05
  %v1246 = vadd.f32 %v1166, 1e-05
  %v1247 = vadd.f32 %v1167, 1e-05
  %v1248 = vadd.f32 %v1168, 1e-05
  %v1249 = vadd.f32 %v1169, 1e-05
  %v1250 = vadd.f32 %v1170, 1e-05
  %v1251 = vadd.f32 %v1171, 1e-05
  %v1252 = vadd.f32 %v1172, 1e-05
  %v1253 = vadd.f32 %v1173, 1e-05
  %v1254 = vadd.f32 %v1174, 1e-05
  %v1255 = vadd.f32 %v1175, 1e-05
  %v1256 = vadd.f32 %v1176, 1e-05
  %v1257 = vadd.f32 %v1177, 1e-05
  %v1258 = vadd.f32 %v1178, 1e-05
  %v1259 = vadd.f32 %v1179, 1e-05
  %v1260 = vadd.f32 %v1180, 1e-05
  %v1261 = vadd.f32 %v1181, 1e-05
  %v1262 = vadd.f32 %v1182, 1e-05
  %v1263 = vadd.f32 %v1183, 1e-05
  %v1264 = vadd.f32 %v1184, 1e-05
  %v1265 = vadd.f32 %v1185, 1e-05
  %v1266 = vadd.f32 %v1186, 1e-05
  %v1267 = vadd.f32 %v1187, 1e-05
  %v1268 = vadd.f32 %v1188, 1e-05
  %v1269 = vadd.f32 %v1189, 1e-05
  %v1270 = vadd.f32 %v1190, 1e-05
  %v1271 = vadd.f32 %v1191, 1e-05
  %v1272 = vadd.f32 %v1192, 1e-05
  %v1273 = vadd.f32 %v1193, 1e-05
  %v1274 = vrsqrt.pop %v1234
  %v1275 = vrsqrt.pop %v1235
  %v1276 = vrsqrt.pop %v1236
  %v1277 = vrsqrt.pop %v1237
  %v1278 = vrsqrt.pop %v1238
  %v1279 = vrsqrt.pop %v1239
  %v1280 = vrsqrt.pop %v1240
  %v1281 = vrsqrt.pop %v1241
  %v1282 = vrsqrt.pop %v1242
  %v1283 = vrsqrt.pop %v1243
  %v1284 = vrsqrt.pop %v1244
  %v1285 = vrsqrt.pop %v1245
  %v1286 = vrsqrt.pop %v1246
  %v1287 = vrsqrt.pop %v1247
  %v1288 = vrsqrt.pop %v1248
  %v1289 = vrsqrt.pop %v1249
  %v1290 = vrsqrt.pop %v1250
  %v1291 = vrsqrt.pop %v1251
  %v1292 = vrsqrt.pop %v1252
  %v1293 = vrsqrt.pop %v1253
  %v1294 = vrsqrt.pop %v1254
  %v1295 = vrsqrt.pop %v1255
  %v1296 = vrsqrt.pop %v1256
  %v1297 = vrsqrt.pop %v1257
  %v1298 = vrsqrt.pop %v1258
  %v1299 = vrsqrt.pop %v1259
  %v1300 = vrsqrt.pop %v1260
  %v1301 = vrsqrt.pop %v1261
  %v1302 = vrsqrt.pop %v1262
  %v1303 = vrsqrt.pop %v1263
  %v1304 = vrsqrt.pop %v1264
  %v1305 = vrsqrt.pop %v1265
  %v1306 = vrsqrt.pop %v1266
  %v1307 = vrsqrt.pop %v1267
  %v1308 = vrsqrt.pop %v1268
  %v1309 = vrsqrt.pop %v1269
  %v1310 = vrsqrt.pop %v1270
  %v1311 = vrsqrt.pop %v1271
  %v1312 = vrsqrt.pop %v1272
  %v1313 = vrsqrt.pop %v1273
  %v1314 = vmul.f32 %v1194, %v1274
  %v1315 = vmul.f32 %v1195, %v1275
  %v1316 = vmul.f32 %v1196, %v1276
  %v1317 = vmul.f32 %v1197, %v1277
  %v1318 = vmul.f32 %v1198, %v1278
  %v1319 = vmul.f32 %v1199, %v1279
  %v1320 = vmul.f32 %v1200, %v1280
  %v1321 = vmul.f32 %v1201, %v1281
  %v1322 = vmul.f32 %v1202, %v1282
  %v1323 = vmul.f32 %v1203, %v1283
  %v1324 = vmul.f32 %v1204, %v1284
  %v1325 = vmul.f32 %v1205, %v1285
  %v1326 = vmul.f32 %v1206, %v1286
  %v1327 = vmul.f32 %v1207, %v1287
  %v1328 = vmul.f32 %v1208, %v1288
  %v1329 = vmul.f32 %v1209, %v1289
  %v1330 = vmul.f32 %v1210, %v1290
  %v1331 = vmul.f32 %v1211, %v1291
  %v1332 = vmul.f32 %v1212, %v1292
  %v1333 = vmul.f32 %v1213, %v1293
  %v1334 = vmul.f32 %v1214, %v1294
  %v1335 = vmul.f32 %v1215, %v1295
  %v1336 = vmul.f32 %v1216, %v1296
  %v1337 = vmul.f32 %v1217, %v1297
  %v1338 = vmul.f32 %v1218, %v1298
  %v1339 = vmul.f32 %v1219, %v1299
  %v1340 = vmul.f32 %v1220, %v1300
  %v1341 = vmul.f32 %v1221, %v1301
  %v1342 = vmul.f32 %v1222, %v1302
  %v1343 = vmul.f32 %v1223, %v1303
  %v1344 = vmul.f32 %v1224, %v1304
  %v1345 = vmul.f32 %v1225, %v1305
  %v1346 = vmul.f32 %v1226, %v1306
  %v1347 = vmul.f32 %v1227, %v1307
  %v1348 = vmul.f32 %v1228, %v1308
  %v1349 = vmul.f32 %v1229, %v1309
  %v1350 = vmul.f32 %v1230, %v1310
  %v1351 = vmul.f32 %v1231, %v1311
  %v1352 = vmul.f32 %v1232, %v1312
  %v1353 = vmul.f32 %v1233, %v1313
  %v1354 = vlaneseq
  %v1355 = vshrl.u32 %v1354, 7
  %v1356 = vsub.s32 0, %v1355
  %v1357 = vrot.slane %v40, %v1356
  %v1358 = vmul.f32 %v1314, %v1357
  %v1359 = vmul.f32 %v1315, %v1357
  %v1360 = vmul.f32 %v1316, %v1357
  %v1361 = vmul.f32 %v1317, %v1357
  %v1362 = vmul.f32 %v1318, %v1357
  %v1363 = vmul.f32 %v1319, %v1357
  %v1364 = vmul.f32 %v1320, %v1357
  %v1365 = vmul.f32 %v1321, %v1357
  %v1366 = vmul.f32 %v1322, %v1357
  %v1367 = vmul.f32 %v1323, %v1357
  %v1368 = vmul.f32 %v1324, %v1357
  %v1369 = vmul.f32 %v1325, %v1357
  %v1370 = vmul.f32 %v1326, %v1357
  %v1371 = vmul.f32 %v1327, %v1357
  %v1372 = vmul.f32 %v1328, %v1357
  %v1373 = vmul.f32 %v1329, %v1357
  %v1374 = vmul.f32 %v1330, %v1357
  %v1375 = vmul.f32 %v1331, %v1357
  %v1376 = vmul.f32 %v1332, %v1357
  %v1377 = vmul.f32 %v1333, %v1357
  %v1378 = vmul.f32 %v1334, %v1357
  %v1379 = vmul.f32 %v1335, %v1357
  %v1380 = vmul.f32 %v1336, %v1357
  %v1381 = vmul.f32 %v1337, %v1357
  %v1382 = vmul.f32 %v1338, %v1357
  %v1383 = vmul.f32 %v1339, %v1357
  %v1384 = vmul.f32 %v1340, %v1357
  %v1385 = vmul.f32 %v1341, %v1357
  %v1386 = vmul.f32 %v1342, %v1357
  %v1387 = vmul.f32 %v1343, %v1357
  %v1388 = vmul.f32 %v1344, %v1357
  %v1389 = vmul.f32 %v1345, %v1357
  %v1390 = vmul.f32 %v1346, %v1357
  %v1391 = vmul.f32 %v1347, %v1357
  %v1392 = vmul.f32 %v1348, %v1357
  %v1393 = vmul.f32 %v1349, %v1357
  %v1394 = vmul.f32 %v1350, %v1357
  %v1395 = vmul.f32 %v1351, %v1357
  %v1396 = vmul.f32 %v1352, %v1357
  %v1397 = vmul.f32 %v1353, %v1357
  %v1398 = vlaneseq
  %v1399 = vshrl.u32 %v1398, 7
  %v1400 = vsub.s32 0, %v1399
  %v1401 = vrot.slane %v41, %v1400
  %v1402 = vadd.f32 %v1358, %v1401
  %v1403 = vadd.f32 %v1359, %v1401
  %v1404 = vadd.f32 %v1360, %v1401
  %v1405 = vadd.f32 %v1361, %v1401
  %v1406 = vadd.f32 %v1362, %v1401
  %v1407 = vadd.f32 %v1363, %v1401
  %v1408 = vadd.f32 %v1364, %v1401
  %v1409 = vadd.f32 %v1365, %v1401
  %v1410 = vadd.f32 %v1366, %v1401
  %v1411 = vadd.f32 %v1367, %v1401
  %v1412 = vadd.f32 %v1368, %v1401
  %v1413 = vadd.f32 %v1369, %v1401
  %v1414 = vadd.f32 %v1370, %v1401
  %v1415 = vadd.f32 %v1371, %v1401
  %v1416 = vadd.f32 %v1372, %v1401
  %v1417 = vadd.f32 %v1373, %v1401
  %v1418 = vadd.f32 %v1374, %v1401
  %v1419 = vadd.f32 %v1375, %v1401
  %v1420 = vadd.f32 %v1376, %v1401
  %v1421 = vadd.f32 %v1377, %v1401
  %v1422 = vadd.f32 %v1378, %v1401
  %v1423 = vadd.f32 %v1379, %v1401
  %v1424 = vadd.f32 %v1380, %v1401
  %v1425 = vadd.f32 %v1381, %v1401
  %v1426 = vadd.f32 %v1382, %v1401
  %v1427 = vadd.f32 %v1383, %v1401
  %v1428 = vadd.f32 %v1384, %v1401
  %v1429 = vadd.f32 %v1385, %v1401
  %v1430 = vadd.f32 %v1386, %v1401
  %v1431 = vadd.f32 %v1387, %v1401
  %v1432 = vadd.f32 %v1388, %v1401
  %v1433 = vadd.f32 %v1389, %v1401
  %v1434 = vadd.f32 %v1390, %v1401
  %v1435 = vadd.f32 %v1391, %v1401
  %v1436 = vadd.f32 %v1392, %v1401
  %v1437 = vadd.f32 %v1393, %v1401
  %v1438 = vadd.f32 %v1394, %v1401
  %v1439 = vadd.f32 %v1395, %v1401
  %v1440 = vadd.f32 %v1396, %v1401
  %v1441 = vadd.f32 %v1397, %v1401
  %v1442 = vmax.f32 %v1402, 0.0
  %v1443 = vmax.f32 %v1403, 0.0
  %v1444 = vmax.f32 %v1404, 0.0
  %v1445 = vmax.f32 %v1405, 0.0
  %v1446 = vmax.f32 %v1406, 0.0
  %v1447 = vmax.f32 %v1407, 0.0
  %v1448 = vmax.f32 %v1408, 0.0
  %v1449 = vmax.f32 %v1409, 0.0
  %v1450 = vmax.f32 %v1410, 0.0
  %v1451 = vmax.f32 %v1411, 0.0
  %v1452 = vmax.f32 %v1412, 0.0
  %v1453 = vmax.f32 %v1413, 0.0
  %v1454 = vmax.f32 %v1414, 0.0
  %v1455 = vmax.f32 %v1415, 0.0
  %v1456 = vmax.f32 %v1416, 0.0
  %v1457 = vmax.f32 %v1417, 0.0
  %v1458 = vmax.f32 %v1418, 0.0
  %v1459 = vmax.f32 %v1419, 0.0
  %v1460 = vmax.f32 %v1420, 0.0
  %v1461 = vmax.f32 %v1421, 0.0
  %v1462 = vmax.f32 %v1422, 0.0
  %v1463 = vmax.f32 %v1423, 0.0
  %v1464 = vmax.f32 %v1424, 0.0
  %v1465 = vmax.f32 %v1425, 0.0
  %v1466 = vmax.f32 %v1426, 0.0
  %v1467 = vmax.f32 %v1427, 0.0
  %v1468 = vmax.f32 %v1428, 0.0
  %v1469 = vmax.f32 %v1429, 0.0
  %v1470 = vmax.f32 %v1430, 0.0
  %v1471 = vmax.f32 %v1431, 0.0
  %v1472 = vmax.f32 %v1432, 0.0
  %v1473 = vmax.f32 %v1433, 0.0
  %v1474 = vmax.f32 %v1434, 0.0
  %v1475 = vmax.f32 %v1435, 0.0
  %v1476 = vmax.f32 %v1436, 0.0
  %v1477 = vmax.f32 %v1437, 0.0
  %v1478 = vmax.f32 %v1438, 0.0
  %v1479 = vmax.f32 %v1439, 0.0
  %v1480 = vmax.f32 %v1440, 0.0
  %v1481 = vmax.f32 %v1441, 0.0
  %v1482 = vpack.c.bf16 %v1443, %v1442
  %v1483 = vpack.c.bf16 %v1445, %v1444
  %v1484 = vpack.c.bf16 %v1447, %v1446
  %v1485 = vpack.c.bf16 %v1449, %v1448
  %v1486 = vpack.c.bf16 %v1451, %v1450
  %v1487 = vpack.c.bf16 %v1453, %v1452
  %v1488 = vpack.c.bf16 %v1455, %v1454
  %v1489 = vpack.c.bf16 %v1457, %v1456
  %v1490 = vpack.c.bf16 %v1459, %v1458
  %v1491 = vpack.c.bf16 %v1461, %v1460
  %v1492 = vpack.c.bf16 %v1463, %v1462
  %v1493 = vpack.c.bf16 %v1465, %v1464
  %v1494 = vpack.c.bf16 %v1467, %v1466
  %v1495 = vpack.c.bf16 %v1469, %v1468
  %v1496 = vpack.c.bf16 %v1471, %v1470
  %v1497 = vpack.c.bf16 %v1473, %v1472
  %v1498 = vpack.c.bf16 %v1475, %v1474
  %v1499 = vpack.c.bf16 %v1477, %v1476
  %v1500 = vpack.c.bf16 %v1479, %v1478
  %v1501 = vpack.c.bf16 %v1481, %v1480
  %v1502 = vld [vmem:[%s4] sm:$0xf]
  %v1503 = vld [vmem:[%s4 + $0x4] sm:$0xf]
  %v1504 = vld [vmem:[%s4 + $0x8] sm:$0xf]
  %v1505 = vld [vmem:[%s4 + $0xc] sm:$0xf]
  %v1506 = vlaneseq
  %v1507 = vshrl.u32 %v1506, 7
  %v1508 = vsub.s32 0, %v1507
  %v1509 = vrot.slane %v42, %v1508
  %v1514 = vunpack.c.l.b16 %v1502
  %v1515 = vunpack.c.l.b16 %v1503
  %v1516 = vunpack.c.l.b16 %v1504
  %v1517 = vunpack.c.l.b16 %v1505
  %v1518 = vpack.c.b16 %v1515, %v1514
  %v1519 = vpack.c.b16 %v1517, %v1516
  %v1523 = vsel %vm499, %v1482, 0
  %v1526 = vsel %vm499, %v1483, 0
  %v1529 = vsel %vm499, %v1484, 0
  %v1532 = vsel %vm499, %v1485, 0
  %v1535 = vsel %vm499, %v1486, 0
  %v1538 = vsel %vm499, %v1487, 0
  %v1541 = vsel %vm499, %v1488, 0
  %v1544 = vsel %vm499, %v1489, 0
  %v1547 = vsel %vm499, %v1490, 0
  %v1550 = vsel %vm499, %v1491, 0
  %v1553 = vsel %vm499, %v1492, 0
  %v1556 = vsel %vm499, %v1493, 0
  %v1559 = vsel %vm499, %v1494, 0
  %v1562 = vsel %vm499, %v1495, 0
  %v1565 = vsel %vm499, %v1496, 0
  %v1568 = vsel %vm499, %v1497, 0
  %v1571 = vsel %vm499, %v1498, 0
  %v1574 = vsel %vm499, %v1499, 0
  %v1577 = vsel %vm499, %v1500, 0
  %v1580 = vsel %vm499, %v1501, 0
  %1582 = vmatprep.subr.bf16.mxu0 0
  %1583 = vmatpush1.bf16.msra.mxu0 %v1518
  %1584 = vmatprep.subr.bf16.mxu0 0
  %1585 = vmatpush1.bf16.msra.mxu0 %v1519
  %1586 = vmatprep.subr.bf16.mxu0 0
  %1587 = vmatpush1.bf16.msra.mxu0 0
  %1588 = vmatprep.subr.bf16.mxu0 0
  %1589 = vmatpush1.bf16.msra.mxu0 0
  %1590 = vmatprep.subr.bf16.mxu0 0
  %1591 = vmatpush1.bf16.msra.mxu0 0
  %1592 = vmatprep.subr.bf16.mxu0 0
  %1593 = vmatpush1.bf16.msra.mxu0 0
  %1594 = vmatprep.subr.bf16.mxu0 0
  %1595 = vmatpush1.bf16.msra.mxu0 0
  %1596 = vmatprep.subr.bf16.mxu0 0
  %1597 = vmatpush1.bf16.msra.mxu0 0
  %1598 = vmatprep.subr.bf16.mxu0 0
  %1599 = vmatpush1.bf16.msra.mxu0 0
  %1600 = vmatprep.subr.bf16.mxu0 0
  %1601 = vmatpush1.bf16.msra.mxu0 0
  %1602 = vmatprep.subr.bf16.mxu0 0
  %1603 = vmatpush1.bf16.msra.mxu0 0
  %1604 = vmatprep.subr.bf16.mxu0 0
  %1605 = vmatpush1.bf16.msra.mxu0 0
  %1606 = vmatprep.subr.bf16.mxu0 0
  %1607 = vmatpush1.bf16.msra.mxu0 0
  %1608 = vmatprep.subr.bf16.mxu0 0
  %1609 = vmatpush1.bf16.msra.mxu0 0
  %1610 = vmatprep.subr.bf16.mxu0 0
  %1611 = vmatpush1.bf16.msra.mxu0 0
  %1612 = vmatprep.subr.bf16.mxu0 0
  %1613 = vmatpush1.bf16.msra.mxu0 0
  %1614 = vmatprep.mubr.bf16.mxu0 0
  %1615 = vmatmul.mubr.bf16.gmra.mrb[0].mxu0 %v1523
  %v1616 = vpop.f32.mrb[0].mxu0
  %v1617 = vadd.f32 %v1509, %v1616
  %v1618 = vpop.f32.mrb[0].mxu0
  %v1619 = vpop.f32.mrb[0].mxu0
  %v1620 = vadd.f32 %v1509, %v1619
  %v1621 = vpop.f32.mrb[0].mxu0
  %1622 = vmatprep.mubr.bf16.mxu0 0
  %1623 = vmatmul.mubr.bf16.gmra.mrb[0].mxu0 %v1526
  %v1624 = vpop.f32.mrb[0].mxu0
  %v1625 = vadd.f32 %v1509, %v1624
  %v1626 = vpop.f32.mrb[0].mxu0
  %v1627 = vpop.f32.mrb[0].mxu0
  %v1628 = vadd.f32 %v1509, %v1627
  %v1629 = vpop.f32.mrb[0].mxu0
  %1630 = vmatprep.mubr.bf16.mxu0 0
  %1631 = vmatmul.mubr.bf16.gmra.mrb[0].mxu0 %v1529
  %v1632 = vpop.f32.mrb[0].mxu0
  %v1633 = vadd.f32 %v1509, %v1632
  %v1634 = vpop.f32.mrb[0].mxu0
  %v1635 = vpop.f32.mrb[0].mxu0
  %v1636 = vadd.f32 %v1509, %v1635
  %v1637 = vpop.f32.mrb[0].mxu0
  %1638 = vmatprep.mubr.bf16.mxu0 0
  %1639 = vmatmul.mubr.bf16.gmra.mrb[0].mxu0 %v1532
  %v1640 = vpop.f32.mrb[0].mxu0
  %v1641 = vadd.f32 %v1509, %v1640
  %v1642 = vpop.f32.mrb[0].mxu0
  %v1643 = vpop.f32.mrb[0].mxu0
  %v1644 = vadd.f32 %v1509, %v1643
  %v1645 = vpop.f32.mrb[0].mxu0
  %1646 = vmatprep.mubr.bf16.mxu0 0
  %1647 = vmatmul.mubr.bf16.gmra.mrb[0].mxu0 %v1535
  %v1648 = vpop.f32.mrb[0].mxu0
  %v1649 = vadd.f32 %v1509, %v1648
  %v1650 = vpop.f32.mrb[0].mxu0
  %v1651 = vpop.f32.mrb[0].mxu0
  %v1652 = vadd.f32 %v1509, %v1651
  %v1653 = vpop.f32.mrb[0].mxu0
  %1654 = vmatprep.mubr.bf16.mxu0 0
  %1655 = vmatmul.mubr.bf16.gmra.mrb[0].mxu0 %v1538
  %v1656 = vpop.f32.mrb[0].mxu0
  %v1657 = vadd.f32 %v1509, %v1656
  %v1658 = vpop.f32.mrb[0].mxu0
  %v1659 = vpop.f32.mrb[0].mxu0
  %v1660 = vadd.f32 %v1509, %v1659
  %v1661 = vpop.f32.mrb[0].mxu0
  %1662 = vmatprep.mubr.bf16.mxu0 0
  %1663 = vmatmul.mubr.bf16.gmra.mrb[0].mxu0 %v1541
  %v1664 = vpop.f32.mrb[0].mxu0
  %v1665 = vadd.f32 %v1509, %v1664
  %v1666 = vpop.f32.mrb[0].mxu0
  %v1667 = vpop.f32.mrb[0].mxu0
  %v1668 = vadd.f32 %v1509, %v1667
  %v1669 = vpop.f32.mrb[0].mxu0
  %1670 = vmatprep.mubr.bf16.mxu0 0
  %1671 = vmatmul.mubr.bf16.gmra.mrb[0].mxu0 %v1544
  %v1672 = vpop.f32.mrb[0].mxu0
  %v1673 = vadd.f32 %v1509, %v1672
  %v1674 = vpop.f32.mrb[0].mxu0
  %v1675 = vpop.f32.mrb[0].mxu0
  %v1676 = vadd.f32 %v1509, %v1675
  %v1677 = vpop.f32.mrb[0].mxu0
  %1678 = vmatprep.mubr.bf16.mxu0 0
  %1679 = vmatmul.mubr.bf16.gmra.mrb[0].mxu0 %v1547
  %v1680 = vpop.f32.mrb[0].mxu0
  %v1681 = vadd.f32 %v1509, %v1680
  %v1682 = vpop.f32.mrb[0].mxu0
  %v1683 = vpop.f32.mrb[0].mxu0
  %v1684 = vadd.f32 %v1509, %v1683
  %v1685 = vpop.f32.mrb[0].mxu0
  %1686 = vmatprep.mubr.bf16.mxu0 0
  %1687 = vmatmul.mubr.bf16.gmra.mrb[0].mxu0 %v1550
  %v1688 = vpop.f32.mrb[0].mxu0
  %v1689 = vadd.f32 %v1509, %v1688
  %v1690 = vpop.f32.mrb[0].mxu0
  %v1691 = vpop.f32.mrb[0].mxu0
  %v1692 = vadd.f32 %v1509, %v1691
  %v1693 = vpop.f32.mrb[0].mxu0
  %1694 = vmatprep.mubr.bf16.mxu0 0
  %1695 = vmatmul.mubr.bf16.gmra.mrb[0].mxu0 %v1553
  %v1696 = vpop.f32.mrb[0].mxu0
  %v1697 = vadd.f32 %v1509, %v1696
  %v1698 = vpop.f32.mrb[0].mxu0
  %v1699 = vpop.f32.mrb[0].mxu0
  %v1700 = vadd.f32 %v1509, %v1699
  %v1701 = vpop.f32.mrb[0].mxu0
  %1702 = vmatprep.mubr.bf16.mxu0 0
  %1703 = vmatmul.mubr.bf16.gmra.mrb[0].mxu0 %v1556
  %v1704 = vpop.f32.mrb[0].mxu0
  %v1705 = vadd.f32 %v1509, %v1704
  %v1706 = vpop.f32.mrb[0].mxu0
  %v1707 = vpop.f32.mrb[0].mxu0
  %v1708 = vadd.f32 %v1509, %v1707
  %v1709 = vpop.f32.mrb[0].mxu0
  %1710 = vmatprep.mubr.bf16.mxu0 0
  %1711 = vmatmul.mubr.bf16.gmra.mrb[0].mxu0 %v1559
  %v1712 = vpop.f32.mrb[0].mxu0
  %v1713 = vadd.f32 %v1509, %v1712
  %v1714 = vpop.f32.mrb[0].mxu0
  %v1715 = vpop.f32.mrb[0].mxu0
  %v1716 = vadd.f32 %v1509, %v1715
  %v1717 = vpop.f32.mrb[0].mxu0
  %1718 = vmatprep.mubr.bf16.mxu0 0
  %1719 = vmatmul.mubr.bf16.gmra.mrb[0].mxu0 %v1562
  %v1720 = vpop.f32.mrb[0].mxu0
  %v1721 = vadd.f32 %v1509, %v1720
  %v1722 = vpop.f32.mrb[0].mxu0
  %v1723 = vpop.f32.mrb[0].mxu0
  %v1724 = vadd.f32 %v1509, %v1723
  %v1725 = vpop.f32.mrb[0].mxu0
  %1726 = vmatprep.mubr.bf16.mxu0 0
  %1727 = vmatmul.mubr.bf16.gmra.mrb[0].mxu0 %v1565
  %v1728 = vpop.f32.mrb[0].mxu0
  %v1729 = vadd.f32 %v1509, %v1728
  %v1730 = vpop.f32.mrb[0].mxu0
  %v1731 = vpop.f32.mrb[0].mxu0
  %v1732 = vadd.f32 %v1509, %v1731
  %v1733 = vpop.f32.mrb[0].mxu0
  %1734 = vmatprep.mubr.bf16.mxu0 0
  %1735 = vmatmul.mubr.bf16.gmra.mrb[0].mxu0 %v1568
  %v1736 = vpop.f32.mrb[0].mxu0
  %v1737 = vadd.f32 %v1509, %v1736
  %v1738 = vpop.f32.mrb[0].mxu0
  %v1739 = vpop.f32.mrb[0].mxu0
  %v1740 = vadd.f32 %v1509, %v1739
  %v1741 = vpop.f32.mrb[0].mxu0
  %1742 = vmatprep.mubr.bf16.mxu0 0
  %1743 = vmatmul.mubr.bf16.gmra.mrb[0].mxu0 %v1571
  %v1744 = vpop.f32.mrb[0].mxu0
  %v1745 = vadd.f32 %v1509, %v1744
  %v1746 = vpop.f32.mrb[0].mxu0
  %v1747 = vpop.f32.mrb[0].mxu0
  %v1748 = vadd.f32 %v1509, %v1747
  %v1749 = vpop.f32.mrb[0].mxu0
  %1750 = vmatprep.mubr.bf16.mxu0 0
  %1751 = vmatmul.mubr.bf16.gmra.mrb[0].mxu0 %v1574
  %v1752 = vpop.f32.mrb[0].mxu0
  %v1753 = vadd.f32 %v1509, %v1752
  %v1754 = vpop.f32.mrb[0].mxu0
  %v1755 = vpop.f32.mrb[0].mxu0
  %v1756 = vadd.f32 %v1509, %v1755
  %v1757 = vpop.f32.mrb[0].mxu0
  %1758 = vmatprep.mubr.bf16.mxu0 0
  %1759 = vmatmul.mubr.bf16.gmra.mrb[0].mxu0 %v1577
  %v1760 = vpop.f32.mrb[0].mxu0
  %v1761 = vadd.f32 %v1509, %v1760
  %v1762 = vpop.f32.mrb[0].mxu0
  %v1763 = vpop.f32.mrb[0].mxu0
  %v1764 = vadd.f32 %v1509, %v1763
  %v1765 = vpop.f32.mrb[0].mxu0
  %1766 = vmatprep.mubr.bf16.mxu0 0
  %1767 = vmatmul.mubr.bf16.gmra.mrb[0].mxu0 %v1580
  %v1768 = vpop.f32.mrb[0].mxu0
  %v1769 = vadd.f32 %v1509, %v1768
  %v1770 = vpop.f32.mrb[0].mxu0
  %v1771 = vpop.f32.mrb[0].mxu0
  %v1772 = vadd.f32 %v1509, %v1771
  %v1773 = vpop.f32.mrb[0].mxu0
  %1774 = vdwg.mxu0
  %v1775 = vsel %vm499, %v1617, 0.0
  %v1776 = vsel %vm499, %v1657, 0.0
  %v1777 = vadd.f32 %v1775, %v1776
  %v1778 = vsel %vm499, %v1697, 0.0
  %v1779 = vadd.f32 %v1777, %v1778
  %v1780 = vsel %vm499, %v1737, 0.0
  %v1781 = vadd.f32 %v1779, %v1780
  %v1782 = vsel %vm499, %v1620, 0.0
  %v1783 = vsel %vm499, %v1660, 0.0
  %v1784 = vadd.f32 %v1782, %v1783
  %v1785 = vsel %vm499, %v1700, 0.0
  %v1786 = vadd.f32 %v1784, %v1785
  %v1787 = vsel %vm499, %v1740, 0.0
  %v1788 = vadd.f32 %v1786, %v1787
  %v1789 = vsel %vm499, %v1625, 0.0
  %v1790 = vsel %vm499, %v1665, 0.0
  %v1791 = vadd.f32 %v1789, %v1790
  %v1792 = vsel %vm499, %v1705, 0.0
  %v1793 = vadd.f32 %v1791, %v1792
  %v1794 = vsel %vm499, %v1745, 0.0
  %v1795 = vadd.f32 %v1793, %v1794
  %v1796 = vsel %vm499, %v1628, 0.0
  %v1797 = vsel %vm499, %v1668, 0.0
  %v1798 = vadd.f32 %v1796, %v1797
  %v1799 = vsel %vm499, %v1708, 0.0
  %v1800 = vadd.f32 %v1798, %v1799
  %v1801 = vsel %vm499, %v1748, 0.0
  %v1802 = vadd.f32 %v1800, %v1801
  %v1803 = vsel %vm499, %v1633, 0.0
  %v1804 = vsel %vm499, %v1673, 0.0
  %v1805 = vadd.f32 %v1803, %v1804
  %v1806 = vsel %vm499, %v1713, 0.0
  %v1807 = vadd.f32 %v1805, %v1806
  %v1808 = vsel %vm499, %v1753, 0.0
  %v1809 = vadd.f32 %v1807, %v1808
  %v1810 = vsel %vm499, %v1636, 0.0
  %v1811 = vsel %vm499, %v1676, 0.0
  %v1812 = vadd.f32 %v1810, %v1811
  %v1813 = vsel %vm499, %v1716, 0.0
  %v1814 = vadd.f32 %v1812, %v1813
  %v1815 = vsel %vm499, %v1756, 0.0
  %v1816 = vadd.f32 %v1814, %v1815
  %v1817 = vsel %vm499, %v1641, 0.0
  %v1818 = vsel %vm499, %v1681, 0.0
  %v1819 = vadd.f32 %v1817, %v1818
  %v1820 = vsel %vm499, %v1721, 0.0
  %v1821 = vadd.f32 %v1819, %v1820
  %v1822 = vsel %vm499, %v1761, 0.0
  %v1823 = vadd.f32 %v1821, %v1822
  %v1824 = vsel %vm499, %v1644, 0.0
  %v1825 = vsel %vm499, %v1684, 0.0
  %v1826 = vadd.f32 %v1824, %v1825
  %v1827 = vsel %vm499, %v1724, 0.0
  %v1828 = vadd.f32 %v1826, %v1827
  %v1829 = vsel %vm499, %v1764, 0.0
  %v1830 = vadd.f32 %v1828, %v1829
  %v1831 = vsel %vm499, %v1649, 0.0
  %v1832 = vsel %vm499, %v1689, 0.0
  %v1833 = vadd.f32 %v1831, %v1832
  %v1834 = vsel %vm499, %v1729, 0.0
  %v1835 = vadd.f32 %v1833, %v1834
  %v1836 = vsel %vm499, %v1769, 0.0
  %v1837 = vadd.f32 %v1835, %v1836
  %v1838 = vsel %vm499, %v1652, 0.0
  %v1839 = vsel %vm499, %v1692, 0.0
  %v1840 = vadd.f32 %v1838, %v1839
  %v1841 = vsel %vm499, %v1732, 0.0
  %v1842 = vadd.f32 %v1840, %v1841
  %v1843 = vsel %vm499, %v1772, 0.0
  %v1844 = vadd.f32 %v1842, %v1843
  %v1845 = vld [vmem:[%s5] sm:$0xff]
  %v1846 = vld [vmem:[%s5 + $0x8] sm:$0xff]
  %v1847 = vld [vmem:[%s5 + $0x10] sm:$0xff]
  %v1848 = vld [vmem:[%s5 + $0x18] sm:$0xff]
  %v1850 = vsel %vm499, %v1781, 0
  %v1853 = vsel %vm499, %v1788, 0
  %v1856 = vsel %vm499, %v1795, 0
  %v1859 = vsel %vm499, %v1802, 0
  %v1862 = vsel %vm499, %v1809, 0
  %v1865 = vsel %vm499, %v1816, 0
  %v1868 = vsel %vm499, %v1823, 0
  %v1871 = vsel %vm499, %v1830, 0
  %v1874 = vsel %vm499, %v1837, 0
  %v1877 = vsel %vm499, %v1844, 0
  %1879 = vmatprep.subr.mxu0 0.0
  %1880 = vmatpush1.msra.mxu0 %v1845
  %1881 = vmatprep.subr.mxu0 0.0
  %1882 = vmatpush1.msra.mxu0 %v1846
  %1883 = vmatprep.subr.mxu0 0.0
  %1884 = vmatpush1.msra.mxu0 %v1847
  %1885 = vmatprep.subr.mxu0 0.0
  %1886 = vmatpush1.msra.mxu0 %v1848
  %1887 = vmatprep.subr.mxu0 0.0
  %1888 = vmatpush1.msra.mxu0 0.0
  %1889 = vmatprep.subr.mxu0 0.0
  %1890 = vmatpush1.msra.mxu0 0.0
  %1891 = vmatprep.subr.mxu0 0.0
  %1892 = vmatpush1.msra.mxu0 0.0
  %1893 = vmatprep.subr.mxu0 0.0
  %1894 = vmatpush1.msra.mxu0 0.0
  %1895 = vmatprep.subr.mxu0 0.0
  %1896 = vmatpush1.msra.mxu0 0.0
  %1897 = vmatprep.subr.mxu0 0.0
  %1898 = vmatpush1.msra.mxu0 0.0
  %1899 = vmatprep.subr.mxu0 0.0
  %1900 = vmatpush1.msra.mxu0 0.0
  %1901 = vmatprep.subr.mxu0 0.0
  %1902 = vmatpush1.msra.mxu0 0.0
  %1903 = vmatprep.subr.mxu0 0.0
  %1904 = vmatpush1.msra.mxu0 0.0
  %1905 = vmatprep.subr.mxu0 0.0
  %1906 = vmatpush1.msra.mxu0 0.0
  %1907 = vmatprep.subr.mxu0 0.0
  %1908 = vmatpush1.msra.mxu0 0.0
  %1909 = vmatprep.subr.mxu0 0.0
  %1910 = vmatpush1.msra.mxu0 0.0
  %1911 = vmatprep.subr.mxu0 0.0
  %1912 = vmatpush1.msra.mxu0 0.0
  %1913 = vmatprep.subr.mxu0 0.0
  %1914 = vmatpush1.msra.mxu0 0.0
  %1915 = vmatprep.subr.mxu0 0.0
  %1916 = vmatpush1.msra.mxu0 0.0
  %1917 = vmatprep.subr.mxu0 0.0
  %1918 = vmatpush1.msra.mxu0 0.0
  %1919 = vmatprep.subr.mxu0 0.0
  %1920 = vmatpush1.msra.mxu0 0.0
  %1921 = vmatprep.subr.mxu0 0.0
  %1922 = vmatpush1.msra.mxu0 0.0
  %1923 = vmatprep.subr.mxu0 0.0
  %1924 = vmatpush1.msra.mxu0 0.0
  %1925 = vmatprep.subr.mxu0 0.0
  %1926 = vmatpush1.msra.mxu0 0.0
  %1927 = vmatprep.subr.mxu0 0.0
  %1928 = vmatpush1.msra.mxu0 0.0
  %1929 = vmatprep.subr.mxu0 0.0
  %1930 = vmatpush1.msra.mxu0 0.0
  %1931 = vmatprep.subr.mxu0 0.0
  %1932 = vmatpush1.msra.mxu0 0.0
  %1933 = vmatprep.subr.mxu0 0.0
  %1934 = vmatpush1.msra.mxu0 0.0
  %1935 = vmatprep.subr.mxu0 0.0
  %1936 = vmatpush1.msra.mxu0 0.0
  %1937 = vmatprep.subr.mxu0 0.0
  %1938 = vmatpush1.msra.mxu0 0.0
  %1939 = vmatprep.subr.mxu0 0.0
  %1940 = vmatpush1.msra.mxu0 0.0
  %1941 = vmatprep.subr.mxu0 0.0
  %1942 = vmatpush1.msra.mxu0 0.0
  %1943 = vmatprep.mubr.f32.mxu0 0.0
  %1944 = vmatmul.mubr.f32.gmra.mrb[0].mxu0 %v1850
  %v1945 = vpop.f32.mrb[0].mxu0
  %v1946 = vadd.f32 0.0, %v1945
  %v1947 = vpop.f32.mrb[0].mxu0
  %1948 = vmatprep.mubr.f32.mxu0 0.0
  %1949 = vmatmul.mubr.f32.gmra.mrb[0].mxu0 %v1853
  %v1950 = vpop.f32.mrb[0].mxu0
  %v1951 = vadd.f32 0.0, %v1950
  %v1952 = vpop.f32.mrb[0].mxu0
  %1953 = vmatprep.mubr.f32.mxu0 0.0
  %1954 = vmatmul.mubr.f32.gmra.mrb[0].mxu0 %v1856
  %v1955 = vpop.f32.mrb[0].mxu0
  %v1956 = vadd.f32 0.0, %v1955
  %v1957 = vpop.f32.mrb[0].mxu0
  %1958 = vmatprep.mubr.f32.mxu0 0.0
  %1959 = vmatmul.mubr.f32.gmra.mrb[0].mxu0 %v1859
  %v1960 = vpop.f32.mrb[0].mxu0
  %v1961 = vadd.f32 0.0, %v1960
  %v1962 = vpop.f32.mrb[0].mxu0
  %1963 = vmatprep.mubr.f32.mxu0 0.0
  %1964 = vmatmul.mubr.f32.gmra.mrb[0].mxu0 %v1862
  %v1965 = vpop.f32.mrb[0].mxu0
  %v1966 = vadd.f32 0.0, %v1965
  %v1967 = vpop.f32.mrb[0].mxu0
  %1968 = vmatprep.mubr.f32.mxu0 0.0
  %1969 = vmatmul.mubr.f32.gmra.mrb[0].mxu0 %v1865
  %v1970 = vpop.f32.mrb[0].mxu0
  %v1971 = vadd.f32 0.0, %v1970
  %v1972 = vpop.f32.mrb[0].mxu0
  %1973 = vmatprep.mubr.f32.mxu0 0.0
  %1974 = vmatmul.mubr.f32.gmra.mrb[0].mxu0 %v1868
  %v1975 = vpop.f32.mrb[0].mxu0
  %v1976 = vadd.f32 0.0, %v1975
  %v1977 = vpop.f32.mrb[0].mxu0
  %1978 = vmatprep.mubr.f32.mxu0 0.0
  %1979 = vmatmul.mubr.f32.gmra.mrb[0].mxu0 %v1871
  %v1980 = vpop.f32.mrb[0].mxu0
  %v1981 = vadd.f32 0.0, %v1980
  %v1982 = vpop.f32.mrb[0].mxu0
  %1983 = vmatprep.mubr.f32.mxu0 0.0
  %1984 = vmatmul.mubr.f32.gmra.mrb[0].mxu0 %v1874
  %v1985 = vpop.f32.mrb[0].mxu0
  %v1986 = vadd.f32 0.0, %v1985
  %v1987 = vpop.f32.mrb[0].mxu0
  %1988 = vmatprep.mubr.f32.mxu0 0.0
  %1989 = vmatmul.mubr.f32.gmra.mrb[0].mxu0 %v1877
  %v1990 = vpop.f32.mrb[0].mxu0
  %v1991 = vadd.f32 0.0, %v1990
  %v1992 = vpop.f32.mrb[0].mxu0
  %1993 = vdwg.mxu0
  %2004 = vrot.lane.b32.xlu0 %v1946, 32
  %v2005 = vpop.permute.xlu0 %2004
  %2006 = vrot.lane.b32.xlu0 %v1951, 32
  %v2007 = vpop.permute.xlu0 %2006
  %2008 = vrot.lane.b32.xlu0 %v1956, 32
  %v2009 = vpop.permute.xlu0 %2008
  %2010 = vrot.lane.b32.xlu0 %v1961, 32
  %v2011 = vpop.permute.xlu0 %2010
  %2012 = vrot.lane.b32.xlu0 %v1966, 32
  %v2013 = vpop.permute.xlu0 %2012
  %2014 = vrot.lane.b32.xlu0 %v1971, 32
  %v2015 = vpop.permute.xlu0 %2014
  %2016 = vrot.lane.b32.xlu0 %v1976, 32
  %v2017 = vpop.permute.xlu0 %2016
  %2018 = vrot.lane.b32.xlu0 %v1981, 32
  %v2019 = vpop.permute.xlu0 %2018
  %2020 = vrot.lane.b32.xlu0 %v1986, 32
  %v2021 = vpop.permute.xlu0 %2020
  %2022 = vrot.lane.b32.xlu0 %v1991, 32
  %v2023 = vpop.permute.xlu0 %2022
  %v2034 = vadd.f32 %v144, %v2005
  %v2035 = vadd.f32 %v147, %v2007
  %v2036 = vadd.f32 %v152, %v2009
  %v2037 = vadd.f32 %v155, %v2011
  %v2038 = vadd.f32 %v160, %v2013
  %v2039 = vadd.f32 %v163, %v2015
  %v2040 = vadd.f32 %v168, %v2017
  %v2041 = vadd.f32 %v171, %v2019
  %v2042 = vadd.f32 %v176, %v2021
  %v2043 = vadd.f32 %v179, %v2023
  %v2044 = vmax.f32 %v2034, 0.0
  %v2045 = vmax.f32 %v2035, 0.0
  %v2046 = vmax.f32 %v2036, 0.0
  %v2047 = vmax.f32 %v2037, 0.0
  %v2048 = vmax.f32 %v2038, 0.0
  %v2049 = vmax.f32 %v2039, 0.0
  %v2050 = vmax.f32 %v2040, 0.0
  %v2051 = vmax.f32 %v2041, 0.0
  %v2052 = vmax.f32 %v2042, 0.0
  %v2053 = vmax.f32 %v2043, 0.0
  %v2054 = vpack.c.bf16 %v2045, %v2044
  %v2055 = vpack.c.bf16 %v2047, %v2046
  %v2056 = vpack.c.bf16 %v2049, %v2048
  %v2057 = vpack.c.bf16 %v2051, %v2050
  %v2058 = vpack.c.bf16 %v2053, %v2052
  %v2059 = vld [vmem:[%s6] sm:$0xf]
  %v2060 = vld [vmem:[%s6 + $0x4] sm:$0xf]
  %v2061 = vld [vmem:[%s6 + $0x8] sm:$0xf]
  %v2062 = vld [vmem:[%s6 + $0xc] sm:$0xf]
  %v2063 = vlaneseq
  %v2064 = vshrl.u32 %v2063, 7
  %v2065 = vsub.s32 0, %v2064
  %v2066 = vrot.slane %v43, %v2065
  %2072 = vrot.lane.b32.xlu0 %v2054, 96
  %v2073 = vpop.permute.xlu0 %2072
  %2074 = vrot.lane.b32.xlu0 %v2055, 96
  %v2075 = vpop.permute.xlu0 %2074
  %2076 = vrot.lane.b32.xlu0 %v2056, 96
  %v2077 = vpop.permute.xlu0 %2076
  %2078 = vrot.lane.b32.xlu0 %v2057, 96
  %v2079 = vpop.permute.xlu0 %2078
  %2080 = vrot.lane.b32.xlu0 %v2058, 96
  %v2081 = vpop.permute.xlu0 %2080
  %v2086 = vunpack.c.l.b16 %v2059
  %v2087 = vunpack.c.l.b16 %v2060
  %v2088 = vunpack.c.l.b16 %v2061
  %v2089 = vunpack.c.l.b16 %v2062
  %v2090 = vpack.c.b16 %v2087, %v2086
  %v2091 = vpack.c.b16 %v2089, %v2088
  %v2095 = vsel %vm499, %v2073, 0
  %v2098 = vsel %vm499, %v2075, 0
  %v2101 = vsel %vm499, %v2077, 0
  %v2104 = vsel %vm499, %v2079, 0
  %v2107 = vsel %vm499, %v2081, 0
  %2109 = vmatprep.subr.bf16.mxu0 0
  %2110 = vmatpush1.bf16.msra.mxu0 %v2090
  %2111 = vmatprep.subr.bf16.mxu0 0
  %2112 = vmatpush1.bf16.msra.mxu0 %v2091
  %2113 = vmatprep.subr.bf16.mxu0 0
  %2114 = vmatpush1.bf16.msra.mxu0 0
  %2115 = vmatprep.subr.bf16.mxu0 0
  %2116 = vmatpush1.bf16.msra.mxu0 0
  %2117 = vmatprep.subr.bf16.mxu0 0
  %2118 = vmatpush1.bf16.msra.mxu0 0
  %2119 = vmatprep.subr.bf16.mxu0 0
  %2120 = vmatpush1.bf16.msra.mxu0 0
  %2121 = vmatprep.subr.bf16.mxu0 0
  %2122 = vmatpush1.bf16.msra.mxu0 0
  %2123 = vmatprep.subr.bf16.mxu0 0
  %2124 = vmatpush1.bf16.msra.mxu0 0
  %2125 = vmatprep.subr.bf16.mxu0 0
  %2126 = vmatpush1.bf16.msra.mxu0 0
  %2127 = vmatprep.subr.bf16.mxu0 0
  %2128 = vmatpush1.bf16.msra.mxu0 0
  %2129 = vmatprep.subr.bf16.mxu0 0
  %2130 = vmatpush1.bf16.msra.mxu0 0
  %2131 = vmatprep.subr.bf16.mxu0 0
  %2132 = vmatpush1.bf16.msra.mxu0 0
  %2133 = vmatprep.subr.bf16.mxu0 0
  %2134 = vmatpush1.bf16.msra.mxu0 0
  %2135 = vmatprep.subr.bf16.mxu0 0
  %2136 = vmatpush1.bf16.msra.mxu0 0
  %2137 = vmatprep.subr.bf16.mxu0 0
  %2138 = vmatpush1.bf16.msra.mxu0 0
  %2139 = vmatprep.subr.bf16.mxu0 0
  %2140 = vmatpush1.bf16.msra.mxu0 0
  %2141 = vmatprep.mubr.bf16.mxu0 0
  %2142 = vmatmul.mubr.bf16.gmra.mrb[0].mxu0 %v2095
  %v2143 = vpop.f32.mrb[0].mxu0
  %v2144 = vadd.f32 %v2066, %v2143
  %v2145 = vpop.f32.mrb[0].mxu0
  %v2146 = vpop.f32.mrb[0].mxu0
  %v2147 = vadd.f32 %v2066, %v2146
  %v2148 = vpop.f32.mrb[0].mxu0
  %2149 = vmatprep.mubr.bf16.mxu0 0
  %2150 = vmatmul.mubr.bf16.gmra.mrb[0].mxu0 %v2098
  %v2151 = vpop.f32.mrb[0].mxu0
  %v2152 = vadd.f32 %v2066, %v2151
  %v2153 = vpop.f32.mrb[0].mxu0
  %v2154 = vpop.f32.mrb[0].mxu0
  %v2155 = vadd.f32 %v2066, %v2154
  %v2156 = vpop.f32.mrb[0].mxu0
  %2157 = vmatprep.mubr.bf16.mxu0 0
  %2158 = vmatmul.mubr.bf16.gmra.mrb[0].mxu0 %v2101
  %v2159 = vpop.f32.mrb[0].mxu0
  %v2160 = vadd.f32 %v2066, %v2159
  %v2161 = vpop.f32.mrb[0].mxu0
  %v2162 = vpop.f32.mrb[0].mxu0
  %v2163 = vadd.f32 %v2066, %v2162
  %v2164 = vpop.f32.mrb[0].mxu0
  %2165 = vmatprep.mubr.bf16.mxu0 0
  %2166 = vmatmul.mubr.bf16.gmra.mrb[0].mxu0 %v2104
  %v2167 = vpop.f32.mrb[0].mxu0
  %v2168 = vadd.f32 %v2066, %v2167
  %v2169 = vpop.f32.mrb[0].mxu0
  %v2170 = vpop.f32.mrb[0].mxu0
  %v2171 = vadd.f32 %v2066, %v2170
  %v2172 = vpop.f32.mrb[0].mxu0
  %2173 = vmatprep.mubr.bf16.mxu0 0
  %2174 = vmatmul.mubr.bf16.gmra.mrb[0].mxu0 %v2107
  %v2175 = vpop.f32.mrb[0].mxu0
  %v2176 = vadd.f32 %v2066, %v2175
  %v2177 = vpop.f32.mrb[0].mxu0
  %v2178 = vpop.f32.mrb[0].mxu0
  %v2179 = vadd.f32 %v2066, %v2178
  %v2180 = vpop.f32.mrb[0].mxu0
  %2181 = vdwg.mxu0
  %v2182 = vsel %vm499, %v2144, 0.0
  %2183 = vadd.xlane.f32.xlu0 %v2182
  %v2184 = vpop.xlane.xlu0 %2183
  %v2185 = vsel %vm499, %v2147, 0.0
  %2186 = vadd.xlane.f32.xlu0 %v2185
  %v2187 = vpop.xlane.xlu0 %2186
  %v2188 = vsel %vm499, %v2152, 0.0
  %2189 = vadd.xlane.f32.xlu0 %v2188
  %v2190 = vpop.xlane.xlu0 %2189
  %v2191 = vsel %vm499, %v2155, 0.0
  %2192 = vadd.xlane.f32.xlu0 %v2191
  %v2193 = vpop.xlane.xlu0 %2192
  %v2194 = vsel %vm499, %v2160, 0.0
  %2195 = vadd.xlane.f32.xlu0 %v2194
  %v2196 = vpop.xlane.xlu0 %2195
  %v2197 = vsel %vm499, %v2163, 0.0
  %2198 = vadd.xlane.f32.xlu0 %v2197
  %v2199 = vpop.xlane.xlu0 %2198
  %v2200 = vsel %vm499, %v2168, 0.0
  %2201 = vadd.xlane.f32.xlu0 %v2200
  %v2202 = vpop.xlane.xlu0 %2201
  %v2203 = vsel %vm499, %v2171, 0.0
  %2204 = vadd.xlane.f32.xlu0 %v2203
  %v2205 = vpop.xlane.xlu0 %2204
  %v2206 = vsel %vm499, %v2176, 0.0
  %2207 = vadd.xlane.f32.xlu0 %v2206
  %v2208 = vpop.xlane.xlu0 %2207
  %v2209 = vsel %vm499, %v2179, 0.0
  %2210 = vadd.xlane.f32.xlu0 %v2209
  %v2211 = vpop.xlane.xlu0 %2210
  %v2212 = vmul.f32 %v2184, %v873
  %v2213 = vmul.f32 %v2187, %v873
  %v2214 = vmul.f32 %v2190, %v873
  %v2215 = vmul.f32 %v2193, %v873
  %v2216 = vmul.f32 %v2196, %v873
  %v2217 = vmul.f32 %v2199, %v873
  %v2218 = vmul.f32 %v2202, %v873
  %v2219 = vmul.f32 %v2205, %v873
  %v2220 = vmul.f32 %v2208, %v873
  %v2221 = vmul.f32 %v2211, %v873
  %v2222 = vmul.f32 %v2144, %v2144
  %v2223 = vmul.f32 %v2147, %v2147
  %v2224 = vmul.f32 %v2152, %v2152
  %v2225 = vmul.f32 %v2155, %v2155
  %v2226 = vmul.f32 %v2160, %v2160
  %v2227 = vmul.f32 %v2163, %v2163
  %v2228 = vmul.f32 %v2168, %v2168
  %v2229 = vmul.f32 %v2171, %v2171
  %v2230 = vmul.f32 %v2176, %v2176
  %v2231 = vmul.f32 %v2179, %v2179
  %v2232 = vsel %vm499, %v2222, 0.0
  %2233 = vadd.xlane.f32.xlu0 %v2232
  %v2234 = vpop.xlane.xlu0 %2233
  %v2235 = vsel %vm499, %v2223, 0.0
  %2236 = vadd.xlane.f32.xlu0 %v2235
  %v2237 = vpop.xlane.xlu0 %2236
  %v2238 = vsel %vm499, %v2224, 0.0
  %2239 = vadd.xlane.f32.xlu0 %v2238
  %v2240 = vpop.xlane.xlu0 %2239
  %v2241 = vsel %vm499, %v2225, 0.0
  %2242 = vadd.xlane.f32.xlu0 %v2241
  %v2243 = vpop.xlane.xlu0 %2242
  %v2244 = vsel %vm499, %v2226, 0.0
  %2245 = vadd.xlane.f32.xlu0 %v2244
  %v2246 = vpop.xlane.xlu0 %2245
  %v2247 = vsel %vm499, %v2227, 0.0
  %2248 = vadd.xlane.f32.xlu0 %v2247
  %v2249 = vpop.xlane.xlu0 %2248
  %v2250 = vsel %vm499, %v2228, 0.0
  %2251 = vadd.xlane.f32.xlu0 %v2250
  %v2252 = vpop.xlane.xlu0 %2251
  %v2253 = vsel %vm499, %v2229, 0.0
  %2254 = vadd.xlane.f32.xlu0 %v2253
  %v2255 = vpop.xlane.xlu0 %2254
  %v2256 = vsel %vm499, %v2230, 0.0
  %2257 = vadd.xlane.f32.xlu0 %v2256
  %v2258 = vpop.xlane.xlu0 %2257
  %v2259 = vsel %vm499, %v2231, 0.0
  %2260 = vadd.xlane.f32.xlu0 %v2259
  %v2261 = vpop.xlane.xlu0 %2260
  %v2262 = vmul.f32 %v2234, %v873
  %v2263 = vmul.f32 %v2237, %v873
  %v2264 = vmul.f32 %v2240, %v873
  %v2265 = vmul.f32 %v2243, %v873
  %v2266 = vmul.f32 %v2246, %v873
  %v2267 = vmul.f32 %v2249, %v873
  %v2268 = vmul.f32 %v2252, %v873
  %v2269 = vmul.f32 %v2255, %v873
  %v2270 = vmul.f32 %v2258, %v873
  %v2271 = vmul.f32 %v2261, %v873
  %v2272 = vmul.f32 %v2212, %v2212
  %v2273 = vmul.f32 %v2213, %v2213
  %v2274 = vmul.f32 %v2214, %v2214
  %v2275 = vmul.f32 %v2215, %v2215
  %v2276 = vmul.f32 %v2216, %v2216
  %v2277 = vmul.f32 %v2217, %v2217
  %v2278 = vmul.f32 %v2218, %v2218
  %v2279 = vmul.f32 %v2219, %v2219
  %v2280 = vmul.f32 %v2220, %v2220
  %v2281 = vmul.f32 %v2221, %v2221
  %v2282 = vsub.f32 %v2262, %v2272
  %v2283 = vsub.f32 %v2263, %v2273
  %v2284 = vsub.f32 %v2264, %v2274
  %v2285 = vsub.f32 %v2265, %v2275
  %v2286 = vsub.f32 %v2266, %v2276
  %v2287 = vsub.f32 %v2267, %v2277
  %v2288 = vsub.f32 %v2268, %v2278
  %v2289 = vsub.f32 %v2269, %v2279
  %v2290 = vsub.f32 %v2270, %v2280
  %v2291 = vsub.f32 %v2271, %v2281
  %v2292 = vsub.f32 %v2144, %v2212
  %v2293 = vsub.f32 %v2147, %v2213
  %v2294 = vsub.f32 %v2152, %v2214
  %v2295 = vsub.f32 %v2155, %v2215
  %v2296 = vsub.f32 %v2160, %v2216
  %v2297 = vsub.f32 %v2163, %v2217
  %v2298 = vsub.f32 %v2168, %v2218
  %v2299 = vsub.f32 %v2171, %v2219
  %v2300 = vsub.f32 %v2176, %v2220
  %v2301 = vsub.f32 %v2179, %v2221
  %v2302 = vadd.f32 %v2282, 1e-05
  %v2303 = vadd.f32 %v2283, 1e-05
  %v2304 = vadd.f32 %v2284, 1e-05
  %v2305 = vadd.f32 %v2285, 1e-05
  %v2306 = vadd.f32 %v2286, 1e-05
  %v2307 = vadd.f32 %v2287, 1e-05
  %v2308 = vadd.f32 %v2288, 1e-05
  %v2309 = vadd.f32 %v2289, 1e-05
  %v2310 = vadd.f32 %v2290, 1e-05
  %v2311 = vadd.f32 %v2291, 1e-05
  %v2312 = vrsqrt.pop %v2302
  %v2313 = vrsqrt.pop %v2303
  %v2314 = vrsqrt.pop %v2304
  %v2315 = vrsqrt.pop %v2305
  %v2316 = vrsqrt.pop %v2306
  %v2317 = vrsqrt.pop %v2307
  %v2318 = vrsqrt.pop %v2308
  %v2319 = vrsqrt.pop %v2309
  %v2320 = vrsqrt.pop %v2310
  %v2321 = vrsqrt.pop %v2311
  %v2322 = vmul.f32 %v2292, %v2312
  %v2323 = vmul.f32 %v2293, %v2313
  %v2324 = vmul.f32 %v2294, %v2314
  %v2325 = vmul.f32 %v2295, %v2315
  %v2326 = vmul.f32 %v2296, %v2316
  %v2327 = vmul.f32 %v2297, %v2317
  %v2328 = vmul.f32 %v2298, %v2318
  %v2329 = vmul.f32 %v2299, %v2319
  %v2330 = vmul.f32 %v2300, %v2320
  %v2331 = vmul.f32 %v2301, %v2321
  %v2332 = vlaneseq
  %v2333 = vshrl.u32 %v2332, 7
  %v2334 = vsub.s32 0, %v2333
  %v2335 = vrot.slane %v44, %v2334
  %v2336 = vmul.f32 %v2322, %v2335
  %v2337 = vmul.f32 %v2323, %v2335
  %v2338 = vmul.f32 %v2324, %v2335
  %v2339 = vmul.f32 %v2325, %v2335
  %v2340 = vmul.f32 %v2326, %v2335
  %v2341 = vmul.f32 %v2327, %v2335
  %v2342 = vmul.f32 %v2328, %v2335
  %v2343 = vmul.f32 %v2329, %v2335
  %v2344 = vmul.f32 %v2330, %v2335
  %v2345 = vmul.f32 %v2331, %v2335
  %v2346 = vlaneseq
  %v2347 = vshrl.u32 %v2346, 7
  %v2348 = vsub.s32 0, %v2347
  %v2349 = vrot.slane %v45, %v2348
  %v2350 = vadd.f32 %v2336, %v2349
  %v2351 = vadd.f32 %v2337, %v2349
  %v2352 = vadd.f32 %v2338, %v2349
  %v2353 = vadd.f32 %v2339, %v2349
  %v2354 = vadd.f32 %v2340, %v2349
  %v2355 = vadd.f32 %v2341, %v2349
  %v2356 = vadd.f32 %v2342, %v2349
  %v2357 = vadd.f32 %v2343, %v2349
  %v2358 = vadd.f32 %v2344, %v2349
  %v2359 = vadd.f32 %v2345, %v2349
  %v2360 = vmax.f32 %v2350, 0.0
  %v2361 = vmax.f32 %v2351, 0.0
  %v2362 = vmax.f32 %v2352, 0.0
  %v2363 = vmax.f32 %v2353, 0.0
  %v2364 = vmax.f32 %v2354, 0.0
  %v2365 = vmax.f32 %v2355, 0.0
  %v2366 = vmax.f32 %v2356, 0.0
  %v2367 = vmax.f32 %v2357, 0.0
  %v2368 = vmax.f32 %v2358, 0.0
  %v2369 = vmax.f32 %v2359, 0.0
  %v2370 = vpack.c.bf16 %v2361, %v2360
  %v2371 = vpack.c.bf16 %v2363, %v2362
  %v2372 = vpack.c.bf16 %v2365, %v2364
  %v2373 = vpack.c.bf16 %v2367, %v2366
  %v2374 = vpack.c.bf16 %v2369, %v2368
  %v2375 = vld [vmem:[%s7] sm:$0xf]
  %v2376 = vld [vmem:[%s7 + $0x4] sm:$0xf]
  %v2377 = vld [vmem:[%s7 + $0x8] sm:$0xf]
  %v2378 = vld [vmem:[%s7 + $0xc] sm:$0xf]
  %s2379 = scalar_lea.vmem %s7, 16
  %v2380 = vld [vmem:[%s2379] sm:$0xf]
  %v2381 = vld [vmem:[%s2379 + $0x4] sm:$0xf]
  %v2382 = vld [vmem:[%s2379 + $0x8] sm:$0xf]
  %v2383 = vld [vmem:[%s2379 + $0xc] sm:$0xf]
  %v2388 = vunpack.c.l.b16 %v2380
  %v2389 = vunpack.c.l.b16 %v2381
  %v2390 = vunpack.c.l.b16 %v2382
  %v2391 = vunpack.c.l.b16 %v2383
  %v2392 = vpack.c.b16 %v2389, %v2388
  %v2393 = vpack.c.b16 %v2391, %v2390
  %v2397 = vsel %vm499, %v2371, 0
  %2399 = vmatprep.subr.bf16.mxu0 0
  %2400 = vmatpush1.bf16.msra.mxu0 %v2392
  %2401 = vmatprep.subr.bf16.mxu0 0
  %2402 = vmatpush1.bf16.msra.mxu0 %v2393
  %2403 = vmatprep.subr.bf16.mxu0 0
  %2404 = vmatpush1.bf16.msra.mxu0 0
  %2405 = vmatprep.subr.bf16.mxu0 0
  %2406 = vmatpush1.bf16.msra.mxu0 0
  %2407 = vmatprep.subr.bf16.mxu0 0
  %2408 = vmatpush1.bf16.msra.mxu0 0
  %2409 = vmatprep.subr.bf16.mxu0 0
  %2410 = vmatpush1.bf16.msra.mxu0 0
  %2411 = vmatprep.subr.bf16.mxu0 0
  %2412 = vmatpush1.bf16.msra.mxu0 0
  %2413 = vmatprep.subr.bf16.mxu0 0
  %2414 = vmatpush1.bf16.msra.mxu0 0
  %2415 = vmatprep.subr.bf16.mxu0 0
  %2416 = vmatpush1.bf16.msra.mxu0 0
  %2417 = vmatprep.subr.bf16.mxu0 0
  %2418 = vmatpush1.bf16.msra.mxu0 0
  %2419 = vmatprep.subr.bf16.mxu0 0
  %2420 = vmatpush1.bf16.msra.mxu0 0
  %2421 = vmatprep.subr.bf16.mxu0 0
  %2422 = vmatpush1.bf16.msra.mxu0 0
  %2423 = vmatprep.subr.bf16.mxu0 0
  %2424 = vmatpush1.bf16.msra.mxu0 0
  %2425 = vmatprep.subr.bf16.mxu0 0
  %2426 = vmatpush1.bf16.msra.mxu0 0
  %2427 = vmatprep.subr.bf16.mxu0 0
  %2428 = vmatpush1.bf16.msra.mxu0 0
  %2429 = vmatprep.subr.bf16.mxu0 0
  %2430 = vmatpush1.bf16.msra.mxu0 0
  %2431 = vmatprep.mubr.bf16.mxu0 0
  %2432 = vmatmul.mubr.bf16.gmra.mrb[0].mxu0 %v2397
  %v2433 = vpop.f32.mrb[0].mxu0
  %v2434 = vadd.f32 0.0, %v2433
  %v2435 = vpop.f32.mrb[0].mxu0
  %v2436 = vpop.f32.mrb[0].mxu0
  %v2437 = vadd.f32 0.0, %v2436
  %v2438 = vpop.f32.mrb[0].mxu0
  %2439 = vdwg.mxu0
  %v2444 = vunpack.c.l.b16 %v2375
  %v2445 = vunpack.c.l.b16 %v2376
  %v2446 = vunpack.c.l.b16 %v2377
  %v2447 = vunpack.c.l.b16 %v2378
  %v2448 = vpack.c.b16 %v2445, %v2444
  %v2449 = vpack.c.b16 %v2447, %v2446
  %v2453 = vsel %vm499, %v2370, 0
  %2455 = vmatprep.subr.bf16.mxu0 0
  %2456 = vmatpush1.bf16.msra.mxu0 %v2448
  %2457 = vmatprep.subr.bf16.mxu0 0
  %2458 = vmatpush1.bf16.msra.mxu0 %v2449
  %2459 = vmatprep.subr.bf16.mxu0 0
  %2460 = vmatpush1.bf16.msra.mxu0 0
  %2461 = vmatprep.subr.bf16.mxu0 0
  %2462 = vmatpush1.bf16.msra.mxu0 0
  %2463 = vmatprep.subr.bf16.mxu0 0
  %2464 = vmatpush1.bf16.msra.mxu0 0
  %2465 = vmatprep.subr.bf16.mxu0 0
  %2466 = vmatpush1.bf16.msra.mxu0 0
  %2467 = vmatprep.subr.bf16.mxu0 0
  %2468 = vmatpush1.bf16.msra.mxu0 0
  %2469 = vmatprep.subr.bf16.mxu0 0
  %2470 = vmatpush1.bf16.msra.mxu0 0
  %2471 = vmatprep.subr.bf16.mxu0 0
  %2472 = vmatpush1.bf16.msra.mxu0 0
  %2473 = vmatprep.subr.bf16.mxu0 0
  %2474 = vmatpush1.bf16.msra.mxu0 0
  %2475 = vmatprep.subr.bf16.mxu0 0
  %2476 = vmatpush1.bf16.msra.mxu0 0
  %2477 = vmatprep.subr.bf16.mxu0 0
  %2478 = vmatpush1.bf16.msra.mxu0 0
  %2479 = vmatprep.subr.bf16.mxu0 0
  %2480 = vmatpush1.bf16.msra.mxu0 0
  %2481 = vmatprep.subr.bf16.mxu0 0
  %2482 = vmatpush1.bf16.msra.mxu0 0
  %2483 = vmatprep.subr.bf16.mxu0 0
  %2484 = vmatpush1.bf16.msra.mxu0 0
  %2485 = vmatprep.subr.bf16.mxu0 0
  %2486 = vmatpush1.bf16.msra.mxu0 0
  %2487 = vmatprep.mubr.bf16.mxu0 0
  %2488 = vmatmul.mubr.bf16.gmra.mrb[0].mxu0 %v2453
  %v2489 = vpop.f32.mrb[0].mxu0
  %v2490 = vadd.f32 %v2434, %v2489
  %v2491 = vpop.f32.mrb[0].mxu0
  %v2492 = vpop.f32.mrb[0].mxu0
  %v2493 = vadd.f32 %v2437, %v2492
  %v2494 = vpop.f32.mrb[0].mxu0
  %2495 = vdwg.mxu0
  %s2496 = scalar_lea.vmem %s7, 32
  %v2497 = vld [vmem:[%s2496] sm:$0xf]
  %v2498 = vld [vmem:[%s2496 + $0x4] sm:$0xf]
  %v2499 = vld [vmem:[%s2496 + $0x8] sm:$0xf]
  %v2500 = vld [vmem:[%s2496 + $0xc] sm:$0xf]
  %v2505 = vunpack.c.l.b16 %v2497
  %v2506 = vunpack.c.l.b16 %v2498
  %v2507 = vunpack.c.l.b16 %v2499
  %v2508 = vunpack.c.l.b16 %v2500
  %v2509 = vpack.c.b16 %v2506, %v2505
  %v2510 = vpack.c.b16 %v2508, %v2507
  %v2514 = vsel %vm499, %v2372, 0
  %2516 = vmatprep.subr.bf16.mxu0 0
  %2517 = vmatpush1.bf16.msra.mxu0 %v2509
  %2518 = vmatprep.subr.bf16.mxu0 0
  %2519 = vmatpush1.bf16.msra.mxu0 %v2510
  %2520 = vmatprep.subr.bf16.mxu0 0
  %2521 = vmatpush1.bf16.msra.mxu0 0
  %2522 = vmatprep.subr.bf16.mxu0 0
  %2523 = vmatpush1.bf16.msra.mxu0 0
  %2524 = vmatprep.subr.bf16.mxu0 0
  %2525 = vmatpush1.bf16.msra.mxu0 0
  %2526 = vmatprep.subr.bf16.mxu0 0
  %2527 = vmatpush1.bf16.msra.mxu0 0
  %2528 = vmatprep.subr.bf16.mxu0 0
  %2529 = vmatpush1.bf16.msra.mxu0 0
  %2530 = vmatprep.subr.bf16.mxu0 0
  %2531 = vmatpush1.bf16.msra.mxu0 0
  %2532 = vmatprep.subr.bf16.mxu0 0
  %2533 = vmatpush1.bf16.msra.mxu0 0
  %2534 = vmatprep.subr.bf16.mxu0 0
  %2535 = vmatpush1.bf16.msra.mxu0 0
  %2536 = vmatprep.subr.bf16.mxu0 0
  %2537 = vmatpush1.bf16.msra.mxu0 0
  %2538 = vmatprep.subr.bf16.mxu0 0
  %2539 = vmatpush1.bf16.msra.mxu0 0
  %2540 = vmatprep.subr.bf16.mxu0 0
  %2541 = vmatpush1.bf16.msra.mxu0 0
  %2542 = vmatprep.subr.bf16.mxu0 0
  %2543 = vmatpush1.bf16.msra.mxu0 0
  %2544 = vmatprep.subr.bf16.mxu0 0
  %2545 = vmatpush1.bf16.msra.mxu0 0
  %2546 = vmatprep.subr.bf16.mxu0 0
  %2547 = vmatpush1.bf16.msra.mxu0 0
  %2548 = vmatprep.mubr.bf16.mxu0 0
  %2549 = vmatmul.mubr.bf16.gmra.mrb[0].mxu0 %v2514
  %v2550 = vpop.f32.mrb[0].mxu0
  %v2551 = vadd.f32 0.0, %v2550
  %v2552 = vpop.f32.mrb[0].mxu0
  %v2553 = vpop.f32.mrb[0].mxu0
  %v2554 = vadd.f32 0.0, %v2553
  %v2555 = vpop.f32.mrb[0].mxu0
  %2556 = vdwg.mxu0
  %v2557 = vadd.f32 %v2490, %v2551
  %v2558 = vadd.f32 %v2493, %v2554
  %s2559 = scalar_lea.vmem %s7, 48
  %v2560 = vld [vmem:[%s2559] sm:$0xf]
  %v2561 = vld [vmem:[%s2559 + $0x4] sm:$0xf]
  %v2562 = vld [vmem:[%s2559 + $0x8] sm:$0xf]
  %v2563 = vld [vmem:[%s2559 + $0xc] sm:$0xf]
  %v2568 = vunpack.c.l.b16 %v2560
  %v2569 = vunpack.c.l.b16 %v2561
  %v2570 = vunpack.c.l.b16 %v2562
  %v2571 = vunpack.c.l.b16 %v2563
  %v2572 = vpack.c.b16 %v2569, %v2568
  %v2573 = vpack.c.b16 %v2571, %v2570
  %v2577 = vsel %vm499, %v2373, 0
  %2579 = vmatprep.subr.bf16.mxu0 0
  %2580 = vmatpush1.bf16.msra.mxu0 %v2572
  %2581 = vmatprep.subr.bf16.mxu0 0
  %2582 = vmatpush1.bf16.msra.mxu0 %v2573
  %2583 = vmatprep.subr.bf16.mxu0 0
  %2584 = vmatpush1.bf16.msra.mxu0 0
  %2585 = vmatprep.subr.bf16.mxu0 0
  %2586 = vmatpush1.bf16.msra.mxu0 0
  %2587 = vmatprep.subr.bf16.mxu0 0
  %2588 = vmatpush1.bf16.msra.mxu0 0
  %2589 = vmatprep.subr.bf16.mxu0 0
  %2590 = vmatpush1.bf16.msra.mxu0 0
  %2591 = vmatprep.subr.bf16.mxu0 0
  %2592 = vmatpush1.bf16.msra.mxu0 0
  %2593 = vmatprep.subr.bf16.mxu0 0
  %2594 = vmatpush1.bf16.msra.mxu0 0
  %2595 = vmatprep.subr.bf16.mxu0 0
  %2596 = vmatpush1.bf16.msra.mxu0 0
  %2597 = vmatprep.subr.bf16.mxu0 0
  %2598 = vmatpush1.bf16.msra.mxu0 0
  %2599 = vmatprep.subr.bf16.mxu0 0
  %2600 = vmatpush1.bf16.msra.mxu0 0
  %2601 = vmatprep.subr.bf16.mxu0 0
  %2602 = vmatpush1.bf16.msra.mxu0 0
  %2603 = vmatprep.subr.bf16.mxu0 0
  %2604 = vmatpush1.bf16.msra.mxu0 0
  %2605 = vmatprep.subr.bf16.mxu0 0
  %2606 = vmatpush1.bf16.msra.mxu0 0
  %2607 = vmatprep.subr.bf16.mxu0 0
  %2608 = vmatpush1.bf16.msra.mxu0 0
  %2609 = vmatprep.subr.bf16.mxu0 0
  %2610 = vmatpush1.bf16.msra.mxu0 0
  %2611 = vmatprep.mubr.bf16.mxu0 0
  %2612 = vmatmul.mubr.bf16.gmra.mrb[0].mxu0 %v2577
  %v2613 = vpop.f32.mrb[0].mxu0
  %v2614 = vadd.f32 0.0, %v2613
  %v2615 = vpop.f32.mrb[0].mxu0
  %v2616 = vpop.f32.mrb[0].mxu0
  %v2617 = vadd.f32 0.0, %v2616
  %v2618 = vpop.f32.mrb[0].mxu0
  %2619 = vdwg.mxu0
  %v2620 = vadd.f32 %v2557, %v2614
  %v2621 = vadd.f32 %v2558, %v2617
  %s2622 = scalar_lea.vmem %s7, 64
  %v2623 = vld [vmem:[%s2622] sm:$0xf]
  %v2624 = vld [vmem:[%s2622 + $0x4] sm:$0xf]
  %v2625 = vld [vmem:[%s2622 + $0x8] sm:$0xf]
  %v2626 = vld [vmem:[%s2622 + $0xc] sm:$0xf]
  %v2631 = vunpack.c.l.b16 %v2623
  %v2632 = vunpack.c.l.b16 %v2624
  %v2633 = vunpack.c.l.b16 %v2625
  %v2634 = vunpack.c.l.b16 %v2626
  %v2635 = vpack.c.b16 %v2632, %v2631
  %v2636 = vpack.c.b16 %v2634, %v2633
  %v2640 = vsel %vm499, %v2374, 0
  %2642 = vmatprep.subr.bf16.mxu0 0
  %2643 = vmatpush1.bf16.msra.mxu0 %v2635
  %2644 = vmatprep.subr.bf16.mxu0 0
  %2645 = vmatpush1.bf16.msra.mxu0 %v2636
  %2646 = vmatprep.subr.bf16.mxu0 0
  %2647 = vmatpush1.bf16.msra.mxu0 0
  %2648 = vmatprep.subr.bf16.mxu0 0
  %2649 = vmatpush1.bf16.msra.mxu0 0
  %2650 = vmatprep.subr.bf16.mxu0 0
  %2651 = vmatpush1.bf16.msra.mxu0 0
  %2652 = vmatprep.subr.bf16.mxu0 0
  %2653 = vmatpush1.bf16.msra.mxu0 0
  %2654 = vmatprep.subr.bf16.mxu0 0
  %2655 = vmatpush1.bf16.msra.mxu0 0
  %2656 = vmatprep.subr.bf16.mxu0 0
  %2657 = vmatpush1.bf16.msra.mxu0 0
  %2658 = vmatprep.subr.bf16.mxu0 0
  %2659 = vmatpush1.bf16.msra.mxu0 0
  %2660 = vmatprep.subr.bf16.mxu0 0
  %2661 = vmatpush1.bf16.msra.mxu0 0
  %2662 = vmatprep.subr.bf16.mxu0 0
  %2663 = vmatpush1.bf16.msra.mxu0 0
  %2664 = vmatprep.subr.bf16.mxu0 0
  %2665 = vmatpush1.bf16.msra.mxu0 0
  %2666 = vmatprep.subr.bf16.mxu0 0
  %2667 = vmatpush1.bf16.msra.mxu0 0
  %2668 = vmatprep.subr.bf16.mxu0 0
  %2669 = vmatpush1.bf16.msra.mxu0 0
  %2670 = vmatprep.subr.bf16.mxu0 0
  %2671 = vmatpush1.bf16.msra.mxu0 0
  %2672 = vmatprep.subr.bf16.mxu0 0
  %2673 = vmatpush1.bf16.msra.mxu0 0
  %2674 = vmatprep.mubr.bf16.mxu0 0
  %2675 = vmatmul.mubr.bf16.gmra.mrb[0].mxu0 %v2640
  %v2676 = vpop.f32.mrb[0].mxu0
  %v2677 = vadd.f32 0.0, %v2676
  %v2678 = vpop.f32.mrb[0].mxu0
  %v2679 = vpop.f32.mrb[0].mxu0
  %v2680 = vadd.f32 0.0, %v2679
  %v2681 = vpop.f32.mrb[0].mxu0
  %2682 = vdwg.mxu0
  %v2683 = vadd.f32 %v2620, %v2677
  %v2684 = vadd.f32 %v2621, %v2680
  %v2685 = vld [vmem:[%s10] sm:$0x1]
  %v2687 = vlaneseq
  %v2688 = vshrl.u32 %v2687, 7
  %v2689 = vsub.s32 0, %v2688
  %v2690 = vrot.slane %v2685, %v2689
  %v2692 = vadd.f32 %v2683, %v2690
  %v2693 = vadd.f32 %v2684, %v2690
  %v2694 = vpack.c.bf16 %v2693, %v2692
  %v2696 = vunpack.c.l.b16 %v2694
  %v2697 = vunpack.c.h.b16 %v2694
  %v2698 = vpack.c.b16 %v2696, %v2696
  %v2699 = vpack.c.b16 %v2697, %v2697
  %2702 = vst [vmem:[%s11] sm:$0xf] %v2698
  %2703 = vst [vmem:[%s11 + $0x4] sm:$0xf] %v2699
  // Predicated region
  $region46: #{transition_gnn_forward.1} parent=0 // pred_check
    _
  $region47: #{transition_gnn_forward.1} parent=0 // pred_check_branch
    %2705 = sbr.rel (0) target = $region49
  $region48: #{transition_gnn_forward.1} parent=0 // pred_region
    _
  $region49: #{transition_gnn_forward.1} parent=0 // pred_fallthru
    _
  // Predicated region
  $region50: #{transition_gnn_forward.1} parent=0 // pred_check
    _
  $region51: #{transition_gnn_forward.1} parent=0 // pred_check_branch
    %2707 = sbr.rel (0) target = $region53
  $region52: #{transition_gnn_forward.1} parent=0 // pred_region
    _
  $region53: #{transition_gnn_forward.1} parent=0 // pred_fallthru
    _

</llo_original>
